<compile_context>
chip_gen: v6e
topology: v6e:2x2x1
jax: 0.10.0
libtpu: 0.0.40
codegen_flags: <defaults>
</compile_context>

<pallas_src>
import functools

import jax
import jax.numpy as jnp
from jax import lax
from jax.experimental import pallas as pl
from jax.experimental.pallas import tpu as pltpu


def _abcnn2_kernel(x1_ref, x2_ref, x1f_ref, x2f_ref, w1_ref, w2_ref, *,
                   max_length, width, match_score):
    """One grid step.

    x1_ref/x2_ref   : (TB, S, D)  per-batch layout, feeds the attention matrix.
    x1f_ref/x2f_ref : (S, TB*D)   lane-dense layout, feeds the weighting/window path.
    w1_ref/w2_ref   : (L, TB*D)   lane-dense float32 outputs (unmasked stores).
    """
    x1 = x1_ref[...]                    # native dtype, fed to the MXU directly
    x2 = x2_ref[...]
    x1_f32 = x1.astype(jnp.float32)
    x2_f32 = x2.astype(jnp.float32)
    TB, S, D = x1.shape
    L = max_length

    # ---- attention-matrix reductions --------------------------------------
    # Only rsum[b,k] = sum_i A[b,i,k] (weights x1) and csum[b,k] = sum_j A[b,k,j]
    # (weights x2) are needed downstream; this matches the PyTorch loop exactly.
    if match_score in ("cosine", "euclidean"):
        # Batched contraction over the last dims: no explicit transpose, f32 MXU acc.
        cross = jnp.einsum("bid,bjd->bij", x1, x2,
                           preferred_element_type=jnp.float32)          # (TB, S, S)
        sq1 = jnp.sum(x1_f32 * x1_f32, axis=-1, keepdims=True)          # (TB, S, 1)
        sq2 = jnp.sum(x2_f32 * x2_f32, axis=-1)[:, None, :]             # (TB, 1, S)
        if match_score == "cosine":
            # rsqrt on the length-S norm vectors instead of reciprocal(sqrt*sqrt)
            # on the (S,S) tile.  No epsilon guard, matching the reference module.
            A = cross * lax.rsqrt(sq1) * lax.rsqrt(sq2)
        else:
            # ||a-b||^2 = |a|^2 + |b|^2 - 2 a.b ; clamp handles f32 cancellation.
            dist = jnp.sqrt(jnp.maximum(sq1 + sq2 - 2.0 * cross, 0.0))
            A = pl.reciprocal(1.0 + dist, approx=True)                  # EUP slot
        rsum = jnp.sum(A, axis=1)                                       # (TB, S)
        csum = jnp.sum(A, axis=2)                                       # (TB, S)
    elif match_score == "manhattan":
        # Column-at-a-time: intermediates keep the natural (TB, S, D) input density,
        # A is never materialized, rsum/csum are accumulated directly.
        rsum = jnp.zeros((TB, S), jnp.float32)
        csum = jnp.zeros((TB, S), jnp.float32)
        lane = lax.broadcasted_iota(jnp.int32, (TB, S), 1)
        for j in range(S):  # S is small & static; unrolled at trace time
            dist_j = jnp.sum(jnp.abs(x1_f32 - x2_f32[:, j:j + 1, :]), axis=-1)
            col_j = pl.reciprocal(1.0 + dist_j, approx=True)            # A[:, :, j]
            csum = csum + col_j
            rsum = rsum + jnp.where(lane == j,
                                    jnp.sum(col_j, axis=1, keepdims=True), 0.0)
    else:
        raise ValueError(f"unknown match_score: {match_score}")

    # ---- windowed weighting on the lane-dense layout -----------------------
    # band[l, s] = 1 iff l <= s < l + width  (constant, built from iota).
    row = lax.broadcasted_iota(jnp.int32, (L, S), 0)
    col = lax.broadcasted_iota(jnp.int32, (L, S), 1)
    band = ((col >= row) & (col < row + width)).astype(jnp.float32)     # (L, S)

    # expand[b, p] = 1 iff p // D == b.  One MXU matmul fuses the (TB,S) -> (S,TB*D)
    # transpose + per-batch lane broadcast with no sublane<->lane relayout.
    brow = lax.broadcasted_iota(jnp.int32, (TB, TB * D), 0)
    pcol = lax.broadcasted_iota(jnp.int32, (TB, TB * D), 1)
    expand = ((pcol >= brow * D) & (pcol < (brow + 1) * D)).astype(jnp.float32)

    r_flat = lax.dot_general(rsum, expand, (((0,), (0,)), ((), ())),
                             preferred_element_type=jnp.float32)        # (S, TB*D)
    c_flat = lax.dot_general(csum, expand, (((0,), (0,)), ((), ())),
                             preferred_element_type=jnp.float32)

    x1_flat = x1f_ref[...].astype(jnp.float32)                          # (S, TB*D)
    x2_flat = x2f_ref[...].astype(jnp.float32)

    # w[l, b*D+d] = sum_s band[l,s] * {r,c}sum[b,s] * x[b,s,d]:
    # the width shift-add loop becomes one constant banded matmul (MXU), so the
    # epilogue has no sublane-misaligned slices and the stores are lane-dense.
    w1_ref[...] = jnp.dot(band, r_flat * x1_flat, preferred_element_type=jnp.float32)
    w2_ref[...] = jnp.dot(band, c_flat * x2_flat, preferred_element_type=jnp.float32)


def _round_up(x, m):
    return ((x + m - 1) // m) * m


def _vmem_bytes_estimate(tb, *, S, D, L, in_itemsize):
    """Layout-aware VMEM footprint for one grid step: every tile's last dim is
    rounded to 128 lanes and its second-to-last to 8 sublanes, so small S/D do
    not get under-counted."""
    f32 = 4
    sp = _round_up(S, 8)
    lp = _round_up(L, 8)
    dp = _round_up(D, 128)
    fp = _round_up(tb * D, 128)
    s_lane = _round_up(S, 128)
    total = 0
    # Pallas pipeline buffers (double-buffered per blocked input/output).
    total += 2 * 2 * tb * sp * dp * in_itemsize        # x1, x2        (tb, S, D)
    total += 2 * 2 * sp * fp * in_itemsize             # x1, x2 flat   (S, tb*D)
    total += 2 * 2 * lp * fp * f32                     # w1, w2 flat   (L, tb*D)
    # In-kernel intermediates (conservative single copies).
    total += 2 * tb * sp * dp * f32                    # f32 casts of x1/x2
    total += 3 * tb * sp * s_lane * f32                # cross / A / dist (tb, S, S)
    total += 4 * sp * fp * f32                         # r_flat/c_flat + weighted flats
    total += tb * sp * dp * f32                        # manhattan per-column |diff|
    return total


def _vmem_limit_bytes():
    """Generation-aware scoped-VMEM request: ~3/4 of physical VMEM (64 MiB/TC on
    v7x, 128 MiB on v5e/v6e), capped at 96 MiB; conservative fallback if the
    hardware query is unavailable."""
    try:
        cap = int(pltpu.get_tpu_info().vmem_capacity_bytes)
    except Exception:
        cap = 64 * 1024 * 1024
    return min((cap * 3) // 4, 96 * 1024 * 1024)


def _pick_block_b(B, *, S, D, L, in_itemsize, budget):
    """Batch rows per grid step.  Prefer a single grid step: the grid is a serial
    loop on 1-TC chips and splitting sub-us steps across v7x's two cores costs more
    in per-step overhead than it saves.  Split only when the single-step footprint
    would blow the VMEM budget, keeping the flat lane width (tb*D) 128-aligned."""
    if _vmem_bytes_estimate(B, S=S, D=D, L=L, in_itemsize=in_itemsize) <= budget:
        return B
    candidates = [d for d in range(1, B + 1)
                  if B % d == 0 and (d == B or (d * D) % 128 == 0)]
    fitting = [d for d in candidates
               if _vmem_bytes_estimate(d, S=S, D=D, L=L, in_itemsize=in_itemsize) <= budget]
    if fitting:
        return max(fitting)
    return min(candidates)  # nothing fits cleanly; smallest legal block


def abcnn2_attention(x1, x2, *, max_length, width, match_score="euclidean"):
    """x1, x2: (B, 1, max_length + width - 1, D) -> (w1, w2): (B, 1, max_length, D) f32."""
    B, C, S, D = x1.shape
    assert C == 1 and S == max_length + width - 1 and x2.shape == x1.shape
    L = max_length

    x1s = x1[:, 0]                                    # (B, S, D)
    x2s = x2[:, 0]
    # Lane-dense second view of the same data, built by XLA outside the kernel so
    # the weighting/window path needs no in-kernel sublane<->lane relayout.
    x1_flat = jnp.transpose(x1s, (1, 0, 2)).reshape(S, B * D)
    x2_flat = jnp.transpose(x2s, (1, 0, 2)).reshape(S, B * D)

    vmem_limit = _vmem_limit_bytes()
    tb = _pick_block_b(B, S=S, D=D, L=L, in_itemsize=x1.dtype.itemsize,
                       budget=vmem_limit)
    assert B % tb == 0
    n_steps = B // tb

    kernel = functools.partial(_abcnn2_kernel, max_length=L, width=width,
                               match_score=match_score)

    bsd_spec = pl.BlockSpec((tb, S, D), lambda b: (b, 0, 0))
    flat_in_spec = pl.BlockSpec((S, tb * D), lambda b: (0, b))
    flat_out_spec = pl.BlockSpec((L, tb * D), lambda b: (0, b))

    w1_flat, w2_flat = pl.pallas_call(
        kernel,
        out_shape=(
            jax.ShapeDtypeStruct((L, B * D), jnp.float32),
            jax.ShapeDtypeStruct((L, B * D), jnp.float32),
        ),
        grid=(n_steps,),
        in_specs=[bsd_spec, bsd_spec, flat_in_spec, flat_in_spec],
        out_specs=(flat_out_spec, flat_out_spec),
        compiler_params=pltpu.CompilerParams(
            dimension_semantics=("parallel",),
            vmem_limit_bytes=vmem_limit,
        ),
    )(x1s, x2s, x1_flat, x2_flat)

    # (L, B*D) -> (B, 1, L, D)
    w1 = jnp.transpose(w1_flat.reshape(L, B, D), (1, 0, 2))[:, None]
    w2 = jnp.transpose(w2_flat.reshape(L, B, D), (1, 0, 2))[:, None]
    return w1, w2


def _reference(x1, x2, *, max_length, width, match_score):
    """Pure-JAX replica of the PyTorch forward (independent of the kernel's math
    path: direct broadcasts, exact divisions, no MXU)."""
    a1 = x1[:, 0].astype(jnp.float32)
    a2 = x2[:, 0].astype(jnp.float32)
    if match_score == "cosine":
        cross = jnp.sum(a1[:, :, None, :] * a2[:, None, :, :], axis=-1)
        n1 = jnp.sqrt(jnp.sum(a1 * a1, axis=-1))
        n2 = jnp.sqrt(jnp.sum(a2 * a2, axis=-1))
        A = cross / (n1[:, :, None] * n2[:, None, :])
    elif match_score == "euclidean":
        d = jnp.sqrt(jnp.sum((a1[:, :, None, :] - a2[:, None, :, :]) ** 2, -1))
        A = 1.0 / (1.0 + d)
    else:  # manhattan
        d = jnp.sum(jnp.abs(a1[:, :, None, :] - a2[:, None, :, :]), -1)
        A = 1.0 / (1.0 + d)
    r = jnp.sum(A, axis=1)          # sum_i A[b, i, k]  -> weights x1
    c = jnp.sum(A, axis=2)          # sum_j A[b, k, j]  -> weights x2
    wx1 = r[..., None] * a1
    wx2 = c[..., None] * a2
    L = max_length
    w1 = sum(wx1[:, off:off + L, :] for off in range(width))
    w2 = sum(wx2[:, off:off + L, :] for off in range(width))
    return w1[:, None], w2[:, None]


if __name__ == "__main__":
    # Small shapes consistent with the module's forward contract.
    batch = 8
    max_length = 8
    width = 4
    output_size = 32
    S = max_length + width - 1  # 11

    key = jax.random.PRNGKey(0)
    k1, k2 = jax.random.split(key)
    x1 = jax.random.normal(k1, (batch, 1, S, output_size), dtype=jnp.float32)
    x2 = jax.random.normal(k2, (batch, 1, S, output_size), dtype=jnp.float32)

    for ms in ("euclidean", "cosine", "manhattan"):
        w1, w2 = abcnn2_attention(x1, x2, max_length=max_length, width=width,
                                  match_score=ms)
        jax.block_until_ready((w1, w2))

        r1, r2 = _reference(x1, x2, max_length=max_length, width=width,
                            match_score=ms)
        assert w1.shape == (batch, 1, max_length, output_size)
        assert w2.shape == (batch, 1, max_length, output_size)
        # 5e-3 tolerance covers the EUP approx-reciprocal path and the MXU
        # |a|^2+|b|^2-2ab euclidean identity vs. the reference's direct form.
        assert jnp.allclose(w1, r1, atol=5e-3, rtol=5e-3), f"{ms}: w1 mismatch"
        assert jnp.allclose(w2, r2, atol=5e-3, rtol=5e-3), f"{ms}: w2 mismatch"

    print("KERNEL_OK")
</pallas_src>

<mosaic_0001>
module attributes {stable_mosaic.version = 11 : i64} {
  func.func @_abcnn2_kernel(%arg0: i32, %arg1: memref<8x11x32xf32, #tpu.memory_space<vmem>>, %arg2: memref<8x11x32xf32, #tpu.memory_space<vmem>>, %arg3: memref<11x256xf32, #tpu.memory_space<vmem>>, %arg4: memref<11x256xf32, #tpu.memory_space<vmem>>, %arg5: memref<8x256xf32, #tpu.memory_space<vmem>>, %arg6: memref<8x256xf32, #tpu.memory_space<vmem>>) attributes {dimension_semantics = [#tpu.dimension_semantics<parallel>], iteration_bounds = array<i64: 1>, scalar_prefetch = 0 : i64, scratch_operands = 0 : i64, tpu.core_type = #tpu.core_type<tc>, window_params = [{transform_indices = @transform_0, window_bounds = array<i64: 8, 11, 32>}, {transform_indices = @transform_1, window_bounds = array<i64: 8, 11, 32>}, {transform_indices = @transform_2, window_bounds = array<i64: 11, 256>}, {transform_indices = @transform_3, window_bounds = array<i64: 11, 256>}, {transform_indices = @transform_4, window_bounds = array<i64: 8, 256>}, {transform_indices = @transform_5, window_bounds = array<i64: 8, 256>}]} {
    %c0 = arith.constant 0 : index
    %c0_0 = arith.constant 0 : index
    %c0_1 = arith.constant 0 : index
    %0 = vector.load %arg1[%c0, %c0_0, %c0_1] : memref<8x11x32xf32, #tpu.memory_space<vmem>>, vector<8x11x32xf32>
    %c0_2 = arith.constant 0 : index
    %c0_3 = arith.constant 0 : index
    %c0_4 = arith.constant 0 : index
    %1 = vector.load %arg2[%c0_2, %c0_3, %c0_4] : memref<8x11x32xf32, #tpu.memory_space<vmem>>, vector<8x11x32xf32>
    "tpu.trace_start"() <{level = 10 : i32, message = "bid,bjd->bij"}> : () -> ()
    %cst = arith.constant dense<0.000000e+00> : vector<8x11x11xf32>
    %2 = tpu.matmul %0, %1, %cst {dimension_numbers = #tpu.dot_dimension_numbers<[2], [2], [1], [1], [0, 0, 0, 1, 1, 1], [0], [0]>} : vector<8x11x32xf32>, vector<8x11x32xf32>, vector<8x11x11xf32> -> vector<8x11x11xf32>
    "tpu.trace_stop"() : () -> ()
    %3 = arith.mulf %0, %0 : vector<8x11x32xf32>
    %cst_5 = arith.constant dense<0.000000e+00> : vector<8x11xf32>
    %4 = vector.multi_reduction <add>, %3, %cst_5 [2] : vector<8x11x32xf32> to vector<8x11xf32>
    %5 = vector.shape_cast %4 : vector<8x11xf32> to vector<8x11x1xf32>
    %6 = arith.mulf %1, %1 : vector<8x11x32xf32>
    %cst_6 = arith.constant dense<0.000000e+00> : vector<8x11xf32>
    %7 = vector.multi_reduction <add>, %6, %cst_6 [2] : vector<8x11x32xf32> to vector<8x11xf32>
    %8 = vector.shape_cast %7 : vector<8x11xf32> to vector<8x1x11xf32>
    %9 = vector.broadcast %5 : vector<8x11x1xf32> to vector<8x11x11xf32>
    %10 = vector.broadcast %8 : vector<8x1x11xf32> to vector<8x11x11xf32>
    %11 = arith.addf %9, %10 : vector<8x11x11xf32>
    %cst_7 = arith.constant 2.000000e+00 : f32
    %12 = vector.broadcast %cst_7 : f32 to vector<8x11x11xf32>
    %13 = arith.mulf %12, %2 : vector<8x11x11xf32>
    %14 = arith.subf %11, %13 : vector<8x11x11xf32>
    %cst_8 = arith.constant 0.000000e+00 : f32
    %15 = vector.broadcast %cst_8 : f32 to vector<8x11x11xf32>
    %16 = arith.maximumf %14, %15 : vector<8x11x11xf32>
    %17 = math.sqrt %16 : vector<8x11x11xf32>
    %cst_9 = arith.constant 1.000000e+00 : f32
    %18 = vector.broadcast %cst_9 : f32 to vector<8x11x11xf32>
    %19 = arith.addf %18, %17 : vector<8x11x11xf32>
    %20 = tpu.reciprocal %19 {approx = true} : vector<8x11x11xf32> -> vector<8x11x11xf32>
    %cst_10 = arith.constant dense<0.000000e+00> : vector<8x11xf32>
    %21 = vector.multi_reduction <add>, %20, %cst_10 [1] : vector<8x11x11xf32> to vector<8x11xf32>
    %cst_11 = arith.constant dense<0.000000e+00> : vector<8x11xf32>
    %22 = vector.multi_reduction <add>, %20, %cst_11 [2] : vector<8x11x11xf32> to vector<8x11xf32>
    %23 = tpu.iota {dimensions = array<i32: 0>} : vector<8x11xi32>
    %24 = tpu.iota {dimensions = array<i32: 1>} : vector<8x11xi32>
    %25 = arith.cmpi sge, %24, %23 : vector<8x11xi32>
    %c4_i32 = arith.constant 4 : i32
    %26 = vector.broadcast %c4_i32 : i32 to vector<8x11xi32>
    %27 = arith.addi %23, %26 : vector<8x11xi32>
    %28 = arith.cmpi slt, %24, %27 : vector<8x11xi32>
    %29 = arith.andi %25, %28 : vector<8x11xi1>
    %30 = arith.extui %29 : vector<8x11xi1> to vector<8x11xi32>
    %31 = arith.sitofp %30 : vector<8x11xi32> to vector<8x11xf32>
    %32 = tpu.iota {dimensions = array<i32: 0>} : vector<8x256xi32>
    %33 = tpu.iota {dimensions = array<i32: 1>} : vector<8x256xi32>
    %c32_i32 = arith.constant 32 : i32
    %34 = vector.broadcast %c32_i32 : i32 to vector<8x256xi32>
    %35 = arith.muli %32, %34 : vector<8x256xi32>
    %36 = arith.cmpi sge, %33, %35 : vector<8x256xi32>
    %c1_i32 = arith.constant 1 : i32
    %37 = vector.broadcast %c1_i32 : i32 to vector<8x256xi32>
    %38 = arith.addi %32, %37 : vector<8x256xi32>
    %c32_i32_12 = arith.constant 32 : i32
    %39 = vector.broadcast %c32_i32_12 : i32 to vector<8x256xi32>
    %40 = arith.muli %38, %39 : vector<8x256xi32>
    %41 = arith.cmpi slt, %33, %40 : vector<8x256xi32>
    %42 = arith.andi %36, %41 : vector<8x256xi1>
    %43 = arith.extui %42 : vector<8x256xi1> to vector<8x256xi32>
    %44 = arith.sitofp %43 : vector<8x256xi32> to vector<8x256xf32>
    %cst_13 = arith.constant dense<0.000000e+00> : vector<11x256xf32>
    %45 = tpu.matmul %21, %44, %cst_13 {dimension_numbers = #tpu.dot_dimension_numbers<[0], [0], [1], [1], [0, 1, 1, 1], [], []>} : vector<8x11xf32>, vector<8x256xf32>, vector<11x256xf32> -> vector<11x256xf32>
    %cst_14 = arith.constant dense<0.000000e+00> : vector<11x256xf32>
    %46 = tpu.matmul %22, %44, %cst_14 {dimension_numbers = #tpu.dot_dimension_numbers<[0], [0], [1], [1], [0, 1, 1, 1], [], []>} : vector<8x11xf32>, vector<8x256xf32>, vector<11x256xf32> -> vector<11x256xf32>
    %c0_15 = arith.constant 0 : index
    %c0_16 = arith.constant 0 : index
    %47 = vector.load %arg3[%c0_15, %c0_16] : memref<11x256xf32, #tpu.memory_space<vmem>>, vector<11x256xf32>
    %c0_17 = arith.constant 0 : index
    %c0_18 = arith.constant 0 : index
    %48 = vector.load %arg4[%c0_17, %c0_18] : memref<11x256xf32, #tpu.memory_space<vmem>>, vector<11x256xf32>
    %49 = arith.mulf %45, %47 : vector<11x256xf32>
    %cst_19 = arith.constant dense<0.000000e+00> : vector<8x256xf32>
    %50 = tpu.matmul %31, %49, %cst_19 {dimension_numbers = #tpu.dot_dimension_numbers<[1], [0], [0], [1], [0, 0, 1, 1], [], []>} : vector<8x11xf32>, vector<11x256xf32>, vector<8x256xf32> -> vector<8x256xf32>
    %c0_20 = arith.constant 0 : index
    %c0_21 = arith.constant 0 : index
    %51 = vector.load %arg5[%c0_20, %c0_21] : memref<8x256xf32, #tpu.memory_space<vmem>>, vector<8x256xf32>
    tpu.vector_store %arg5[%c0_20, %c0_21], %50 {strides = array<i32>} : memref<8x256xf32, #tpu.memory_space<vmem>>, vector<8x256xf32>,
    %52 = arith.mulf %46, %48 : vector<11x256xf32>
    %cst_22 = arith.constant dense<0.000000e+00> : vector<8x256xf32>
    %53 = tpu.matmul %31, %52, %cst_22 {dimension_numbers = #tpu.dot_dimension_numbers<[1], [0], [0], [1], [0, 0, 1, 1], [], []>} : vector<8x11xf32>, vector<11x256xf32>, vector<8x256xf32> -> vector<8x256xf32>
    %c0_23 = arith.constant 0 : index
    %c0_24 = arith.constant 0 : index
    %54 = vector.load %arg6[%c0_23, %c0_24] : memref<8x256xf32, #tpu.memory_space<vmem>>, vector<8x256xf32>
    tpu.vector_store %arg6[%c0_23, %c0_24], %53 {strides = array<i32>} : memref<8x256xf32, #tpu.memory_space<vmem>>, vector<8x256xf32>,
    return
  }
  func.func @transform_0(%arg0: i32) -> (i32, i32, i32) {
    %c0_i32 = arith.constant 0 : i32
    %c0_i32_0 = arith.constant 0 : i32
    %c0_i32_1 = arith.constant 0 : i32
    return %arg0, %c0_i32, %c0_i32_0 : i32, i32, i32
  }
  func.func @transform_1(%arg0: i32) -> (i32, i32, i32) {
    %c0_i32 = arith.constant 0 : i32
    %c0_i32_0 = arith.constant 0 : i32
    %c0_i32_1 = arith.constant 0 : i32
    return %arg0, %c0_i32, %c0_i32_0 : i32, i32, i32
  }
  func.func @transform_2(%arg0: i32) -> (i32, i32) {
    %c0_i32 = arith.constant 0 : i32
    %c0_i32_0 = arith.constant 0 : i32
    return %c0_i32, %arg0 : i32, i32
  }
  func.func @transform_3(%arg0: i32) -> (i32, i32) {
    %c0_i32 = arith.constant 0 : i32
    %c0_i32_0 = arith.constant 0 : i32
    return %c0_i32, %arg0 : i32, i32
  }
  func.func @transform_4(%arg0: i32) -> (i32, i32) {
    %c0_i32 = arith.constant 0 : i32
    %c0_i32_0 = arith.constant 0 : i32
    return %c0_i32, %arg0 : i32, i32
  }
  func.func @transform_5(%arg0: i32) -> (i32, i32) {
    %c0_i32 = arith.constant 0 : i32
    %c0_i32_0 = arith.constant 0 : i32
    return %c0_i32, %arg0 : i32, i32
  }
}

</mosaic_0001>

<llo_original>
// kernel: tpu_custom_call.1
$region0: #{tpu_custom_call.1}
  #allocation0 [shape = 'u32[]', space=smem, size = 0x4, offset = 0x4, fixed_abs, tag = 'smem constant byte address 0x4 - core index']
  #allocation1 [shape = 'u32[144,128]{1,0:T(1,128)}', space=vmem, size = 0x12000, scoped, tag = 'internal scratch']
  %s0 = inlined_call_operand.vmem [shape: f32[8,11,32], index: 0, kind: input, shape index: {}]
  %s1 = inlined_call_operand.vmem [shape: f32[8,11,32], index: 1, kind: input, shape index: {}]
  %s2 = inlined_call_operand.vmem [shape: f32[11,256], index: 2, kind: input, shape index: {}]
  %s3 = inlined_call_operand.vmem [shape: f32[11,256], index: 3, kind: input, shape index: {}]
  %s4 = inlined_call_operand.hbm [shape: f32[8,256], index: 4, kind: output, shape index: {0}]
  %s5 = inlined_call_operand.hbm [shape: f32[8,256], index: 5, kind: output, shape index: {1}]
  %6 = xla_tuple %s4, %s5
  %s7 = sld [smem:[#allocation0]]
  $region34: #{tpu_custom_call.1} parent=0
    _
  %s9 = ssub.s32 1, %s7
  %s10 = scalar_select 0, %s9, %s7
  $region1: #{tpu_custom_call.1} parent=0
    #allocation2 [shape = 'u8[8192]{0}', space=vmem, size = 0x2000, scoped, tag = 'output window, operand 0, single buffered']
    #allocation3 [shape = 's32[1]{0}', space=sflag, size = 0x4, scoped, tag = 'scoped memory for tpu_custom_call.1']
    #allocation4 [shape = 'u8[8192]{0}', space=vmem, size = 0x2000, scoped, tag = 'output window, operand 1, single buffered']
    #allocation5 [shape = 's32[1]{0}', space=sflag, size = 0x4, scoped, tag = 'scoped memory for tpu_custom_call.1']
    %11 = vsyncpa [#allocation3], 0
    %12 = vsyncpa [#allocation5], 0
    // Predicated region
    $region2: #{tpu_custom_call.1} parent=1 // pred_check
      _
    $region3: #{tpu_custom_call.1} parent=1 // pred_check_branch
      %14 = sbr.rel (0) target = $region5
    $region4: #{tpu_custom_call.1} parent=1 // pred_region
      _
    $region5: #{tpu_custom_call.1} parent=1 // pred_fallthru
      _
    // Predicated region
    $region6: #{tpu_custom_call.1} parent=1 // pred_check
      _
    $region7: #{tpu_custom_call.1} parent=1 // pred_check_branch
      %16 = sbr.rel (0) target = $region9
    $region8: #{tpu_custom_call.1} parent=1 // pred_region
      _
    $region9: #{tpu_custom_call.1} parent=1 // pred_fallthru
      _
    // Predicated region
    $region10: #{tpu_custom_call.1} parent=1 // pred_check
      _
    $region11: #{tpu_custom_call.1} parent=1 // pred_check_branch
      %18 = sbr.rel (0) target = $region13
    $region12: #{tpu_custom_call.1} parent=1 // pred_region
      _
    $region13: #{tpu_custom_call.1} parent=1 // pred_fallthru
      _
    // Predicated region
    $region14: #{tpu_custom_call.1} parent=1 // pred_check
      _
    $region15: #{tpu_custom_call.1} parent=1 // pred_check_branch
      %20 = sbr.rel (0) target = $region17
    $region16: #{tpu_custom_call.1} parent=1 // pred_region
      _
    $region17: #{tpu_custom_call.1} parent=1 // pred_fallthru
      _
    %v21 = vld [vmem:[%s0] sm:$0xff]
    %v22 = vld [vmem:[%s0 + $0x8] sm:$0x7]
    %v23 = vld [vmem:[%s0 + $0x10] sm:$0xff]
    %v24 = vld [vmem:[%s0 + $0x18] sm:$0x7]
    %v25 = vld [vmem:[%s0 + $0x20] sm:$0xff]
    %v26 = vld [vmem:[%s0 + $0x28] sm:$0x7]
    %v27 = vld [vmem:[%s0 + $0x30] sm:$0xff]
    %v28 = vld [vmem:[%s0 + $0x38] sm:$0x7]
    %v29 = vld [vmem:[%s0 + $0x40] sm:$0xff]
    %v30 = vld [vmem:[%s0 + $0x48] sm:$0x7]
    %v31 = vld [vmem:[%s0 + $0x50] sm:$0xff]
    %v32 = vld [vmem:[%s0 + $0x58] sm:$0x7]
    %v33 = vld [vmem:[%s0 + $0x60] sm:$0xff]
    %v34 = vld [vmem:[%s0 + $0x68] sm:$0x7]
    %v35 = vld [vmem:[%s0 + $0x70] sm:$0xff]
    %v36 = vld [vmem:[%s0 + $0x78] sm:$0x7]
    %v37 = vld [vmem:[%s1] sm:$0xff]
    %v38 = vld [vmem:[%s1 + $0x8] sm:$0x7]
    %v39 = vld [vmem:[%s1 + $0x10] sm:$0xff]
    %v40 = vld [vmem:[%s1 + $0x18] sm:$0x7]
    %v41 = vld [vmem:[%s1 + $0x20] sm:$0xff]
    %v42 = vld [vmem:[%s1 + $0x28] sm:$0x7]
    %v43 = vld [vmem:[%s1 + $0x30] sm:$0xff]
    %v44 = vld [vmem:[%s1 + $0x38] sm:$0x7]
    %v45 = vld [vmem:[%s1 + $0x40] sm:$0xff]
    %v46 = vld [vmem:[%s1 + $0x48] sm:$0x7]
    %v47 = vld [vmem:[%s1 + $0x50] sm:$0xff]
    %v48 = vld [vmem:[%s1 + $0x58] sm:$0x7]
    %v49 = vld [vmem:[%s1 + $0x60] sm:$0xff]
    %v50 = vld [vmem:[%s1 + $0x68] sm:$0x7]
    %v51 = vld [vmem:[%s1 + $0x70] sm:$0xff]
    %v52 = vld [vmem:[%s1 + $0x78] sm:$0x7]
    %vm53 = vcmask 261120
    %v55 = vsel %vm53, %v21, 0
    %v58 = vsel %vm53, %v22, 0
    %v61 = vsel %vm53, %v37, 0
    %v64 = vsel %vm53, %v38, 0
    %66 = vmatprep.subr.mxu0 0.0
    %67 = vmatpush1.xpose.msra.mxu0 0.0
    %68 = vmatprep.subr.mxu0 0.0
    %69 = vmatpush1.xpose.msra.mxu0 0.0
    %70 = vmatprep.subr.mxu0 0.0
    %71 = vmatpush1.xpose.msra.mxu0 0.0
    %72 = vmatprep.subr.mxu0 0.0
    %73 = vmatpush1.xpose.msra.mxu0 0.0
    %74 = vmatprep.subr.mxu0 0.0
    %75 = vmatpush1.xpose.msra.mxu0 0.0
    %76 = vmatprep.subr.mxu0 0.0
    %77 = vmatpush1.xpose.msra.mxu0 0.0
    %78 = vmatprep.subr.mxu0 0.0
    %79 = vmatpush1.xpose.msra.mxu0 0.0
    %80 = vmatprep.subr.mxu0 0.0
    %81 = vmatpush1.xpose.msra.mxu0 0.0
    %82 = vmatprep.subr.mxu0 0.0
    %83 = vmatpush1.xpose.msra.mxu0 0.0
    %84 = vmatprep.subr.mxu0 0.0
    %85 = vmatpush1.xpose.msra.mxu0 0.0
    %86 = vmatprep.subr.mxu0 0.0
    %87 = vmatpush1.xpose.msra.mxu0 0.0
    %88 = vmatprep.subr.mxu0 0.0
    %89 = vmatpush1.xpose.msra.mxu0 0.0
    %90 = vmatprep.subr.mxu0 0.0
    %91 = vmatpush1.xpose.msra.mxu0 0.0
    %92 = vmatprep.subr.mxu0 0.0
    %93 = vmatpush1.xpose.msra.mxu0 0.0
    %94 = vmatprep.subr.mxu0 0.0
    %95 = vmatpush1.xpose.msra.mxu0 %v64
    %96 = vmatprep.subr.mxu0 0.0
    %97 = vmatpush1.xpose.msra.mxu0 %v61
    %98 = vmatprep.subr.mxu0 0.0
    %99 = vmatpush2.xpose.msra.mxu0 0.0
    %100 = vmatprep.subr.mxu0 0.0
    %101 = vmatpush2.xpose.msra.mxu0 0.0
    %102 = vmatprep.subr.mxu0 0.0
    %103 = vmatpush2.xpose.msra.mxu0 0.0
    %104 = vmatprep.subr.mxu0 0.0
    %105 = vmatpush2.xpose.msra.mxu0 0.0
    %106 = vmatprep.subr.mxu0 0.0
    %107 = vmatpush2.xpose.msra.mxu0 0.0
    %108 = vmatprep.subr.mxu0 0.0
    %109 = vmatpush2.xpose.msra.mxu0 0.0
    %110 = vmatprep.subr.mxu0 0.0
    %111 = vmatpush2.xpose.msra.mxu0 0.0
    %112 = vmatprep.subr.mxu0 0.0
    %113 = vmatpush2.xpose.msra.mxu0 0.0
    %114 = vmatprep.subr.mxu0 0.0
    %115 = vmatpush2.xpose.msra.mxu0 0.0
    %116 = vmatprep.subr.mxu0 0.0
    %117 = vmatpush2.xpose.msra.mxu0 0.0
    %118 = vmatprep.subr.mxu0 0.0
    %119 = vmatpush2.xpose.msra.mxu0 0.0
    %120 = vmatprep.subr.mxu0 0.0
    %121 = vmatpush2.xpose.msra.mxu0 0.0
    %122 = vmatprep.subr.mxu0 0.0
    %123 = vmatpush2.xpose.msra.mxu0 0.0
    %124 = vmatprep.subr.mxu0 0.0
    %125 = vmatpush2.xpose.msra.mxu0 0.0
    %126 = vmatprep.subr.mxu0 0.0
    %127 = vmatpush2.xpose.msra.mxu0 0.0
    %128 = vmatprep.subr.mxu0 0.0
    %129 = vmatpush2.xpose.msra.mxu0 0.0
    %130 = vmatprep.mubr.f32.mxu0 0.0
    %131 = vmatmul.mubr.f32.gmra.mxu0 %v55
    %v132 = vpop.f32.mrf.mxu0
    %v133 = vadd.f32 0.0, %v132
    %v134 = vpop.f32.mrf.mxu0
    %135 = vmatprep.mubr.f32.mxu0 0.0
    %136 = vmatmul.mubr.f32.gmra.mxu0 %v58
    %v137 = vpop.f32.mrf.mxu0
    %v138 = vadd.f32 0.0, %v137
    %v139 = vpop.f32.mrf.mxu0
    %140 = vdwg.mxu0
    %v142 = vsel %vm53, %v23, 0
    %v145 = vsel %vm53, %v24, 0
    %v148 = vsel %vm53, %v39, 0
    %v151 = vsel %vm53, %v40, 0
    %153 = vmatprep.subr.mxu0 0.0
    %154 = vmatpush1.xpose.msra.mxu0 0.0
    %155 = vmatprep.subr.mxu0 0.0
    %156 = vmatpush1.xpose.msra.mxu0 0.0
    %157 = vmatprep.subr.mxu0 0.0
    %158 = vmatpush1.xpose.msra.mxu0 0.0
    %159 = vmatprep.subr.mxu0 0.0
    %160 = vmatpush1.xpose.msra.mxu0 0.0
    %161 = vmatprep.subr.mxu0 0.0
    %162 = vmatpush1.xpose.msra.mxu0 0.0
    %163 = vmatprep.subr.mxu0 0.0
    %164 = vmatpush1.xpose.msra.mxu0 0.0
    %165 = vmatprep.subr.mxu0 0.0
    %166 = vmatpush1.xpose.msra.mxu0 0.0
    %167 = vmatprep.subr.mxu0 0.0
    %168 = vmatpush1.xpose.msra.mxu0 0.0
    %169 = vmatprep.subr.mxu0 0.0
    %170 = vmatpush1.xpose.msra.mxu0 0.0
    %171 = vmatprep.subr.mxu0 0.0
    %172 = vmatpush1.xpose.msra.mxu0 0.0
    %173 = vmatprep.subr.mxu0 0.0
    %174 = vmatpush1.xpose.msra.mxu0 0.0
    %175 = vmatprep.subr.mxu0 0.0
    %176 = vmatpush1.xpose.msra.mxu0 0.0
    %177 = vmatprep.subr.mxu0 0.0
    %178 = vmatpush1.xpose.msra.mxu0 0.0
    %179 = vmatprep.subr.mxu0 0.0
    %180 = vmatpush1.xpose.msra.mxu0 0.0
    %181 = vmatprep.subr.mxu0 0.0
    %182 = vmatpush1.xpose.msra.mxu0 %v151
    %183 = vmatprep.subr.mxu0 0.0
    %184 = vmatpush1.xpose.msra.mxu0 %v148
    %185 = vmatprep.subr.mxu0 0.0
    %186 = vmatpush2.xpose.msra.mxu0 0.0
    %187 = vmatprep.subr.mxu0 0.0
    %188 = vmatpush2.xpose.msra.mxu0 0.0
    %189 = vmatprep.subr.mxu0 0.0
    %190 = vmatpush2.xpose.msra.mxu0 0.0
    %191 = vmatprep.subr.mxu0 0.0
    %192 = vmatpush2.xpose.msra.mxu0 0.0
    %193 = vmatprep.subr.mxu0 0.0
    %194 = vmatpush2.xpose.msra.mxu0 0.0
    %195 = vmatprep.subr.mxu0 0.0
    %196 = vmatpush2.xpose.msra.mxu0 0.0
    %197 = vmatprep.subr.mxu0 0.0
    %198 = vmatpush2.xpose.msra.mxu0 0.0
    %199 = vmatprep.subr.mxu0 0.0
    %200 = vmatpush2.xpose.msra.mxu0 0.0
    %201 = vmatprep.subr.mxu0 0.0
    %202 = vmatpush2.xpose.msra.mxu0 0.0
    %203 = vmatprep.subr.mxu0 0.0
    %204 = vmatpush2.xpose.msra.mxu0 0.0
    %205 = vmatprep.subr.mxu0 0.0
    %206 = vmatpush2.xpose.msra.mxu0 0.0
    %207 = vmatprep.subr.mxu0 0.0
    %208 = vmatpush2.xpose.msra.mxu0 0.0
    %209 = vmatprep.subr.mxu0 0.0
    %210 = vmatpush2.xpose.msra.mxu0 0.0
    %211 = vmatprep.subr.mxu0 0.0
    %212 = vmatpush2.xpose.msra.mxu0 0.0
    %213 = vmatprep.subr.mxu0 0.0
    %214 = vmatpush2.xpose.msra.mxu0 0.0
    %215 = vmatprep.subr.mxu0 0.0
    %216 = vmatpush2.xpose.msra.mxu0 0.0
    %217 = vmatprep.mubr.f32.mxu0 0.0
    %218 = vmatmul.mubr.f32.gmra.mxu0 %v142
    %v219 = vpop.f32.mrf.mxu0
    %v220 = vadd.f32 0.0, %v219
    %v221 = vpop.f32.mrf.mxu0
    %222 = vmatprep.mubr.f32.mxu0 0.0
    %223 = vmatmul.mubr.f32.gmra.mxu0 %v145
    %v224 = vpop.f32.mrf.mxu0
    %v225 = vadd.f32 0.0, %v224
    %v226 = vpop.f32.mrf.mxu0
    %227 = vdwg.mxu0
    %v229 = vsel %vm53, %v25, 0
    %v232 = vsel %vm53, %v26, 0
    %v235 = vsel %vm53, %v41, 0
    %v238 = vsel %vm53, %v42, 0
    %240 = vmatprep.subr.mxu0 0.0
    %241 = vmatpush1.xpose.msra.mxu0 0.0
    %242 = vmatprep.subr.mxu0 0.0
    %243 = vmatpush1.xpose.msra.mxu0 0.0
    %244 = vmatprep.subr.mxu0 0.0
    %245 = vmatpush1.xpose.msra.mxu0 0.0
    %246 = vmatprep.subr.mxu0 0.0
    %247 = vmatpush1.xpose.msra.mxu0 0.0
    %248 = vmatprep.subr.mxu0 0.0
    %249 = vmatpush1.xpose.msra.mxu0 0.0
    %250 = vmatprep.subr.mxu0 0.0
    %251 = vmatpush1.xpose.msra.mxu0 0.0
    %252 = vmatprep.subr.mxu0 0.0
    %253 = vmatpush1.xpose.msra.mxu0 0.0
    %254 = vmatprep.subr.mxu0 0.0
    %255 = vmatpush1.xpose.msra.mxu0 0.0
    %256 = vmatprep.subr.mxu0 0.0
    %257 = vmatpush1.xpose.msra.mxu0 0.0
    %258 = vmatprep.subr.mxu0 0.0
    %259 = vmatpush1.xpose.msra.mxu0 0.0
    %260 = vmatprep.subr.mxu0 0.0
    %261 = vmatpush1.xpose.msra.mxu0 0.0
    %262 = vmatprep.subr.mxu0 0.0
    %263 = vmatpush1.xpose.msra.mxu0 0.0
    %264 = vmatprep.subr.mxu0 0.0
    %265 = vmatpush1.xpose.msra.mxu0 0.0
    %266 = vmatprep.subr.mxu0 0.0
    %267 = vmatpush1.xpose.msra.mxu0 0.0
    %268 = vmatprep.subr.mxu0 0.0
    %269 = vmatpush1.xpose.msra.mxu0 %v238
    %270 = vmatprep.subr.mxu0 0.0
    %271 = vmatpush1.xpose.msra.mxu0 %v235
    %272 = vmatprep.subr.mxu0 0.0
    %273 = vmatpush2.xpose.msra.mxu0 0.0
    %274 = vmatprep.subr.mxu0 0.0
    %275 = vmatpush2.xpose.msra.mxu0 0.0
    %276 = vmatprep.subr.mxu0 0.0
    %277 = vmatpush2.xpose.msra.mxu0 0.0
    %278 = vmatprep.subr.mxu0 0.0
    %279 = vmatpush2.xpose.msra.mxu0 0.0
    %280 = vmatprep.subr.mxu0 0.0
    %281 = vmatpush2.xpose.msra.mxu0 0.0
    %282 = vmatprep.subr.mxu0 0.0
    %283 = vmatpush2.xpose.msra.mxu0 0.0
    %284 = vmatprep.subr.mxu0 0.0
    %285 = vmatpush2.xpose.msra.mxu0 0.0
    %286 = vmatprep.subr.mxu0 0.0
    %287 = vmatpush2.xpose.msra.mxu0 0.0
    %288 = vmatprep.subr.mxu0 0.0
    %289 = vmatpush2.xpose.msra.mxu0 0.0
    %290 = vmatprep.subr.mxu0 0.0
    %291 = vmatpush2.xpose.msra.mxu0 0.0
    %292 = vmatprep.subr.mxu0 0.0
    %293 = vmatpush2.xpose.msra.mxu0 0.0
    %294 = vmatprep.subr.mxu0 0.0
    %295 = vmatpush2.xpose.msra.mxu0 0.0
    %296 = vmatprep.subr.mxu0 0.0
    %297 = vmatpush2.xpose.msra.mxu0 0.0
    %298 = vmatprep.subr.mxu0 0.0
    %299 = vmatpush2.xpose.msra.mxu0 0.0
    %300 = vmatprep.subr.mxu0 0.0
    %301 = vmatpush2.xpose.msra.mxu0 0.0
    %302 = vmatprep.subr.mxu0 0.0
    %303 = vmatpush2.xpose.msra.mxu0 0.0
    %304 = vmatprep.mubr.f32.mxu0 0.0
    %305 = vmatmul.mubr.f32.gmra.mxu0 %v229
    %v306 = vpop.f32.mrf.mxu0
    %v307 = vadd.f32 0.0, %v306
    %v308 = vpop.f32.mrf.mxu0
    %309 = vmatprep.mubr.f32.mxu0 0.0
    %310 = vmatmul.mubr.f32.gmra.mxu0 %v232
    %v311 = vpop.f32.mrf.mxu0
    %v312 = vadd.f32 0.0, %v311
    %v313 = vpop.f32.mrf.mxu0
    %314 = vdwg.mxu0
    %v316 = vsel %vm53, %v27, 0
    %v319 = vsel %vm53, %v28, 0
    %v322 = vsel %vm53, %v43, 0
    %v325 = vsel %vm53, %v44, 0
    %327 = vmatprep.subr.mxu0 0.0
    %328 = vmatpush1.xpose.msra.mxu0 0.0
    %329 = vmatprep.subr.mxu0 0.0
    %330 = vmatpush1.xpose.msra.mxu0 0.0
    %331 = vmatprep.subr.mxu0 0.0
    %332 = vmatpush1.xpose.msra.mxu0 0.0
    %333 = vmatprep.subr.mxu0 0.0
    %334 = vmatpush1.xpose.msra.mxu0 0.0
    %335 = vmatprep.subr.mxu0 0.0
    %336 = vmatpush1.xpose.msra.mxu0 0.0
    %337 = vmatprep.subr.mxu0 0.0
    %338 = vmatpush1.xpose.msra.mxu0 0.0
    %339 = vmatprep.subr.mxu0 0.0
    %340 = vmatpush1.xpose.msra.mxu0 0.0
    %341 = vmatprep.subr.mxu0 0.0
    %342 = vmatpush1.xpose.msra.mxu0 0.0
    %343 = vmatprep.subr.mxu0 0.0
    %344 = vmatpush1.xpose.msra.mxu0 0.0
    %345 = vmatprep.subr.mxu0 0.0
    %346 = vmatpush1.xpose.msra.mxu0 0.0
    %347 = vmatprep.subr.mxu0 0.0
    %348 = vmatpush1.xpose.msra.mxu0 0.0
    %349 = vmatprep.subr.mxu0 0.0
    %350 = vmatpush1.xpose.msra.mxu0 0.0
    %351 = vmatprep.subr.mxu0 0.0
    %352 = vmatpush1.xpose.msra.mxu0 0.0
    %353 = vmatprep.subr.mxu0 0.0
    %354 = vmatpush1.xpose.msra.mxu0 0.0
    %355 = vmatprep.subr.mxu0 0.0
    %356 = vmatpush1.xpose.msra.mxu0 %v325
    %357 = vmatprep.subr.mxu0 0.0
    %358 = vmatpush1.xpose.msra.mxu0 %v322
    %359 = vmatprep.subr.mxu0 0.0
    %360 = vmatpush2.xpose.msra.mxu0 0.0
    %361 = vmatprep.subr.mxu0 0.0
    %362 = vmatpush2.xpose.msra.mxu0 0.0
    %363 = vmatprep.subr.mxu0 0.0
    %364 = vmatpush2.xpose.msra.mxu0 0.0
    %365 = vmatprep.subr.mxu0 0.0
    %366 = vmatpush2.xpose.msra.mxu0 0.0
    %367 = vmatprep.subr.mxu0 0.0
    %368 = vmatpush2.xpose.msra.mxu0 0.0
    %369 = vmatprep.subr.mxu0 0.0
    %370 = vmatpush2.xpose.msra.mxu0 0.0
    %371 = vmatprep.subr.mxu0 0.0
    %372 = vmatpush2.xpose.msra.mxu0 0.0
    %373 = vmatprep.subr.mxu0 0.0
    %374 = vmatpush2.xpose.msra.mxu0 0.0
    %375 = vmatprep.subr.mxu0 0.0
    %376 = vmatpush2.xpose.msra.mxu0 0.0
    %377 = vmatprep.subr.mxu0 0.0
    %378 = vmatpush2.xpose.msra.mxu0 0.0
    %379 = vmatprep.subr.mxu0 0.0
    %380 = vmatpush2.xpose.msra.mxu0 0.0
    %381 = vmatprep.subr.mxu0 0.0
    %382 = vmatpush2.xpose.msra.mxu0 0.0
    %383 = vmatprep.subr.mxu0 0.0
    %384 = vmatpush2.xpose.msra.mxu0 0.0
    %385 = vmatprep.subr.mxu0 0.0
    %386 = vmatpush2.xpose.msra.mxu0 0.0
    %387 = vmatprep.subr.mxu0 0.0
    %388 = vmatpush2.xpose.msra.mxu0 0.0
    %389 = vmatprep.subr.mxu0 0.0
    %390 = vmatpush2.xpose.msra.mxu0 0.0
    %391 = vmatprep.mubr.f32.mxu0 0.0
    %392 = vmatmul.mubr.f32.gmra.mxu0 %v316
    %v393 = vpop.f32.mrf.mxu0
    %v394 = vadd.f32 0.0, %v393
    %v395 = vpop.f32.mrf.mxu0
    %396 = vmatprep.mubr.f32.mxu0 0.0
    %397 = vmatmul.mubr.f32.gmra.mxu0 %v319
    %v398 = vpop.f32.mrf.mxu0
    %v399 = vadd.f32 0.0, %v398
    %v400 = vpop.f32.mrf.mxu0
    %401 = vdwg.mxu0
    %v403 = vsel %vm53, %v29, 0
    %v406 = vsel %vm53, %v30, 0
    %v409 = vsel %vm53, %v45, 0
    %v412 = vsel %vm53, %v46, 0
    %414 = vmatprep.subr.mxu0 0.0
    %415 = vmatpush1.xpose.msra.mxu0 0.0
    %416 = vmatprep.subr.mxu0 0.0
    %417 = vmatpush1.xpose.msra.mxu0 0.0
    %418 = vmatprep.subr.mxu0 0.0
    %419 = vmatpush1.xpose.msra.mxu0 0.0
    %420 = vmatprep.subr.mxu0 0.0
    %421 = vmatpush1.xpose.msra.mxu0 0.0
    %422 = vmatprep.subr.mxu0 0.0
    %423 = vmatpush1.xpose.msra.mxu0 0.0
    %424 = vmatprep.subr.mxu0 0.0
    %425 = vmatpush1.xpose.msra.mxu0 0.0
    %426 = vmatprep.subr.mxu0 0.0
    %427 = vmatpush1.xpose.msra.mxu0 0.0
    %428 = vmatprep.subr.mxu0 0.0
    %429 = vmatpush1.xpose.msra.mxu0 0.0
    %430 = vmatprep.subr.mxu0 0.0
    %431 = vmatpush1.xpose.msra.mxu0 0.0
    %432 = vmatprep.subr.mxu0 0.0
    %433 = vmatpush1.xpose.msra.mxu0 0.0
    %434 = vmatprep.subr.mxu0 0.0
    %435 = vmatpush1.xpose.msra.mxu0 0.0
    %436 = vmatprep.subr.mxu0 0.0
    %437 = vmatpush1.xpose.msra.mxu0 0.0
    %438 = vmatprep.subr.mxu0 0.0
    %439 = vmatpush1.xpose.msra.mxu0 0.0
    %440 = vmatprep.subr.mxu0 0.0
    %441 = vmatpush1.xpose.msra.mxu0 0.0
    %442 = vmatprep.subr.mxu0 0.0
    %443 = vmatpush1.xpose.msra.mxu0 %v412
    %444 = vmatprep.subr.mxu0 0.0
    %445 = vmatpush1.xpose.msra.mxu0 %v409
    %446 = vmatprep.subr.mxu0 0.0
    %447 = vmatpush2.xpose.msra.mxu0 0.0
    %448 = vmatprep.subr.mxu0 0.0
    %449 = vmatpush2.xpose.msra.mxu0 0.0
    %450 = vmatprep.subr.mxu0 0.0
    %451 = vmatpush2.xpose.msra.mxu0 0.0
    %452 = vmatprep.subr.mxu0 0.0
    %453 = vmatpush2.xpose.msra.mxu0 0.0
    %454 = vmatprep.subr.mxu0 0.0
    %455 = vmatpush2.xpose.msra.mxu0 0.0
    %456 = vmatprep.subr.mxu0 0.0
    %457 = vmatpush2.xpose.msra.mxu0 0.0
    %458 = vmatprep.subr.mxu0 0.0
    %459 = vmatpush2.xpose.msra.mxu0 0.0
    %460 = vmatprep.subr.mxu0 0.0
    %461 = vmatpush2.xpose.msra.mxu0 0.0
    %462 = vmatprep.subr.mxu0 0.0
    %463 = vmatpush2.xpose.msra.mxu0 0.0
    %464 = vmatprep.subr.mxu0 0.0
    %465 = vmatpush2.xpose.msra.mxu0 0.0
    %466 = vmatprep.subr.mxu0 0.0
    %467 = vmatpush2.xpose.msra.mxu0 0.0
    %468 = vmatprep.subr.mxu0 0.0
    %469 = vmatpush2.xpose.msra.mxu0 0.0
    %470 = vmatprep.subr.mxu0 0.0
    %471 = vmatpush2.xpose.msra.mxu0 0.0
    %472 = vmatprep.subr.mxu0 0.0
    %473 = vmatpush2.xpose.msra.mxu0 0.0
    %474 = vmatprep.subr.mxu0 0.0
    %475 = vmatpush2.xpose.msra.mxu0 0.0
    %476 = vmatprep.subr.mxu0 0.0
    %477 = vmatpush2.xpose.msra.mxu0 0.0
    %478 = vmatprep.mubr.f32.mxu0 0.0
    %479 = vmatmul.mubr.f32.gmra.mxu0 %v403
    %v480 = vpop.f32.mrf.mxu0
    %v481 = vadd.f32 0.0, %v480
    %v482 = vpop.f32.mrf.mxu0
    %483 = vmatprep.mubr.f32.mxu0 0.0
    %484 = vmatmul.mubr.f32.gmra.mxu0 %v406
    %v485 = vpop.f32.mrf.mxu0
    %v486 = vadd.f32 0.0, %v485
    %v487 = vpop.f32.mrf.mxu0
    %488 = vdwg.mxu0
    %v490 = vsel %vm53, %v31, 0
    %v493 = vsel %vm53, %v32, 0
    %v496 = vsel %vm53, %v47, 0
    %v499 = vsel %vm53, %v48, 0
    %501 = vmatprep.subr.mxu0 0.0
    %502 = vmatpush1.xpose.msra.mxu0 0.0
    %503 = vmatprep.subr.mxu0 0.0
    %504 = vmatpush1.xpose.msra.mxu0 0.0
    %505 = vmatprep.subr.mxu0 0.0
    %506 = vmatpush1.xpose.msra.mxu0 0.0
    %507 = vmatprep.subr.mxu0 0.0
    %508 = vmatpush1.xpose.msra.mxu0 0.0
    %509 = vmatprep.subr.mxu0 0.0
    %510 = vmatpush1.xpose.msra.mxu0 0.0
    %511 = vmatprep.subr.mxu0 0.0
    %512 = vmatpush1.xpose.msra.mxu0 0.0
    %513 = vmatprep.subr.mxu0 0.0
    %514 = vmatpush1.xpose.msra.mxu0 0.0
    %515 = vmatprep.subr.mxu0 0.0
    %516 = vmatpush1.xpose.msra.mxu0 0.0
    %517 = vmatprep.subr.mxu0 0.0
    %518 = vmatpush1.xpose.msra.mxu0 0.0
    %519 = vmatprep.subr.mxu0 0.0
    %520 = vmatpush1.xpose.msra.mxu0 0.0
    %521 = vmatprep.subr.mxu0 0.0
    %522 = vmatpush1.xpose.msra.mxu0 0.0
    %523 = vmatprep.subr.mxu0 0.0
    %524 = vmatpush1.xpose.msra.mxu0 0.0
    %525 = vmatprep.subr.mxu0 0.0
    %526 = vmatpush1.xpose.msra.mxu0 0.0
    %527 = vmatprep.subr.mxu0 0.0
    %528 = vmatpush1.xpose.msra.mxu0 0.0
    %529 = vmatprep.subr.mxu0 0.0
    %530 = vmatpush1.xpose.msra.mxu0 %v499
    %531 = vmatprep.subr.mxu0 0.0
    %532 = vmatpush1.xpose.msra.mxu0 %v496
    %533 = vmatprep.subr.mxu0 0.0
    %534 = vmatpush2.xpose.msra.mxu0 0.0
    %535 = vmatprep.subr.mxu0 0.0
    %536 = vmatpush2.xpose.msra.mxu0 0.0
    %537 = vmatprep.subr.mxu0 0.0
    %538 = vmatpush2.xpose.msra.mxu0 0.0
    %539 = vmatprep.subr.mxu0 0.0
    %540 = vmatpush2.xpose.msra.mxu0 0.0
    %541 = vmatprep.subr.mxu0 0.0
    %542 = vmatpush2.xpose.msra.mxu0 0.0
    %543 = vmatprep.subr.mxu0 0.0
    %544 = vmatpush2.xpose.msra.mxu0 0.0
    %545 = vmatprep.subr.mxu0 0.0
    %546 = vmatpush2.xpose.msra.mxu0 0.0
    %547 = vmatprep.subr.mxu0 0.0
    %548 = vmatpush2.xpose.msra.mxu0 0.0
    %549 = vmatprep.subr.mxu0 0.0
    %550 = vmatpush2.xpose.msra.mxu0 0.0
    %551 = vmatprep.subr.mxu0 0.0
    %552 = vmatpush2.xpose.msra.mxu0 0.0
    %553 = vmatprep.subr.mxu0 0.0
    %554 = vmatpush2.xpose.msra.mxu0 0.0
    %555 = vmatprep.subr.mxu0 0.0
    %556 = vmatpush2.xpose.msra.mxu0 0.0
    %557 = vmatprep.subr.mxu0 0.0
    %558 = vmatpush2.xpose.msra.mxu0 0.0
    %559 = vmatprep.subr.mxu0 0.0
    %560 = vmatpush2.xpose.msra.mxu0 0.0
    %561 = vmatprep.subr.mxu0 0.0
    %562 = vmatpush2.xpose.msra.mxu0 0.0
    %563 = vmatprep.subr.mxu0 0.0
    %564 = vmatpush2.xpose.msra.mxu0 0.0
    %565 = vmatprep.mubr.f32.mxu0 0.0
    %566 = vmatmul.mubr.f32.gmra.mxu0 %v490
    %v567 = vpop.f32.mrf.mxu0
    %v568 = vadd.f32 0.0, %v567
    %v569 = vpop.f32.mrf.mxu0
    %570 = vmatprep.mubr.f32.mxu0 0.0
    %571 = vmatmul.mubr.f32.gmra.mxu0 %v493
    %v572 = vpop.f32.mrf.mxu0
    %v573 = vadd.f32 0.0, %v572
    %v574 = vpop.f32.mrf.mxu0
    %575 = vdwg.mxu0
    %v577 = vsel %vm53, %v33, 0
    %v580 = vsel %vm53, %v34, 0
    %v583 = vsel %vm53, %v49, 0
    %v586 = vsel %vm53, %v50, 0
    %588 = vmatprep.subr.mxu0 0.0
    %589 = vmatpush1.xpose.msra.mxu0 0.0
    %590 = vmatprep.subr.mxu0 0.0
    %591 = vmatpush1.xpose.msra.mxu0 0.0
    %592 = vmatprep.subr.mxu0 0.0
    %593 = vmatpush1.xpose.msra.mxu0 0.0
    %594 = vmatprep.subr.mxu0 0.0
    %595 = vmatpush1.xpose.msra.mxu0 0.0
    %596 = vmatprep.subr.mxu0 0.0
    %597 = vmatpush1.xpose.msra.mxu0 0.0
    %598 = vmatprep.subr.mxu0 0.0
    %599 = vmatpush1.xpose.msra.mxu0 0.0
    %600 = vmatprep.subr.mxu0 0.0
    %601 = vmatpush1.xpose.msra.mxu0 0.0
    %602 = vmatprep.subr.mxu0 0.0
    %603 = vmatpush1.xpose.msra.mxu0 0.0
    %604 = vmatprep.subr.mxu0 0.0
    %605 = vmatpush1.xpose.msra.mxu0 0.0
    %606 = vmatprep.subr.mxu0 0.0
    %607 = vmatpush1.xpose.msra.mxu0 0.0
    %608 = vmatprep.subr.mxu0 0.0
    %609 = vmatpush1.xpose.msra.mxu0 0.0
    %610 = vmatprep.subr.mxu0 0.0
    %611 = vmatpush1.xpose.msra.mxu0 0.0
    %612 = vmatprep.subr.mxu0 0.0
    %613 = vmatpush1.xpose.msra.mxu0 0.0
    %614 = vmatprep.subr.mxu0 0.0
    %615 = vmatpush1.xpose.msra.mxu0 0.0
    %616 = vmatprep.subr.mxu0 0.0
    %617 = vmatpush1.xpose.msra.mxu0 %v586
    %618 = vmatprep.subr.mxu0 0.0
    %619 = vmatpush1.xpose.msra.mxu0 %v583
    %620 = vmatprep.subr.mxu0 0.0
    %621 = vmatpush2.xpose.msra.mxu0 0.0
    %622 = vmatprep.subr.mxu0 0.0
    %623 = vmatpush2.xpose.msra.mxu0 0.0
    %624 = vmatprep.subr.mxu0 0.0
    %625 = vmatpush2.xpose.msra.mxu0 0.0
    %626 = vmatprep.subr.mxu0 0.0
    %627 = vmatpush2.xpose.msra.mxu0 0.0
    %628 = vmatprep.subr.mxu0 0.0
    %629 = vmatpush2.xpose.msra.mxu0 0.0
    %630 = vmatprep.subr.mxu0 0.0
    %631 = vmatpush2.xpose.msra.mxu0 0.0
    %632 = vmatprep.subr.mxu0 0.0
    %633 = vmatpush2.xpose.msra.mxu0 0.0
    %634 = vmatprep.subr.mxu0 0.0
    %635 = vmatpush2.xpose.msra.mxu0 0.0
    %636 = vmatprep.subr.mxu0 0.0
    %637 = vmatpush2.xpose.msra.mxu0 0.0
    %638 = vmatprep.subr.mxu0 0.0
    %639 = vmatpush2.xpose.msra.mxu0 0.0
    %640 = vmatprep.subr.mxu0 0.0
    %641 = vmatpush2.xpose.msra.mxu0 0.0
    %642 = vmatprep.subr.mxu0 0.0
    %643 = vmatpush2.xpose.msra.mxu0 0.0
    %644 = vmatprep.subr.mxu0 0.0
    %645 = vmatpush2.xpose.msra.mxu0 0.0
    %646 = vmatprep.subr.mxu0 0.0
    %647 = vmatpush2.xpose.msra.mxu0 0.0
    %648 = vmatprep.subr.mxu0 0.0
    %649 = vmatpush2.xpose.msra.mxu0 0.0
    %650 = vmatprep.subr.mxu0 0.0
    %651 = vmatpush2.xpose.msra.mxu0 0.0
    %652 = vmatprep.mubr.f32.mxu0 0.0
    %653 = vmatmul.mubr.f32.gmra.mxu0 %v577
    %v654 = vpop.f32.mrf.mxu0
    %v655 = vadd.f32 0.0, %v654
    %v656 = vpop.f32.mrf.mxu0
    %657 = vmatprep.mubr.f32.mxu0 0.0
    %658 = vmatmul.mubr.f32.gmra.mxu0 %v580
    %v659 = vpop.f32.mrf.mxu0
    %v660 = vadd.f32 0.0, %v659
    %v661 = vpop.f32.mrf.mxu0
    %662 = vdwg.mxu0
    %v664 = vsel %vm53, %v35, 0
    %v667 = vsel %vm53, %v36, 0
    %v670 = vsel %vm53, %v51, 0
    %v673 = vsel %vm53, %v52, 0
    %675 = vmatprep.subr.mxu0 0.0
    %676 = vmatpush1.xpose.msra.mxu0 0.0
    %677 = vmatprep.subr.mxu0 0.0
    %678 = vmatpush1.xpose.msra.mxu0 0.0
    %679 = vmatprep.subr.mxu0 0.0
    %680 = vmatpush1.xpose.msra.mxu0 0.0
    %681 = vmatprep.subr.mxu0 0.0
    %682 = vmatpush1.xpose.msra.mxu0 0.0
    %683 = vmatprep.subr.mxu0 0.0
    %684 = vmatpush1.xpose.msra.mxu0 0.0
    %685 = vmatprep.subr.mxu0 0.0
    %686 = vmatpush1.xpose.msra.mxu0 0.0
    %687 = vmatprep.subr.mxu0 0.0
    %688 = vmatpush1.xpose.msra.mxu0 0.0
    %689 = vmatprep.subr.mxu0 0.0
    %690 = vmatpush1.xpose.msra.mxu0 0.0
    %691 = vmatprep.subr.mxu0 0.0
    %692 = vmatpush1.xpose.msra.mxu0 0.0
    %693 = vmatprep.subr.mxu0 0.0
    %694 = vmatpush1.xpose.msra.mxu0 0.0
    %695 = vmatprep.subr.mxu0 0.0
    %696 = vmatpush1.xpose.msra.mxu0 0.0
    %697 = vmatprep.subr.mxu0 0.0
    %698 = vmatpush1.xpose.msra.mxu0 0.0
    %699 = vmatprep.subr.mxu0 0.0
    %700 = vmatpush1.xpose.msra.mxu0 0.0
    %701 = vmatprep.subr.mxu0 0.0
    %702 = vmatpush1.xpose.msra.mxu0 0.0
    %703 = vmatprep.subr.mxu0 0.0
    %704 = vmatpush1.xpose.msra.mxu0 %v673
    %705 = vmatprep.subr.mxu0 0.0
    %706 = vmatpush1.xpose.msra.mxu0 %v670
    %707 = vmatprep.subr.mxu0 0.0
    %708 = vmatpush2.xpose.msra.mxu0 0.0
    %709 = vmatprep.subr.mxu0 0.0
    %710 = vmatpush2.xpose.msra.mxu0 0.0
    %711 = vmatprep.subr.mxu0 0.0
    %712 = vmatpush2.xpose.msra.mxu0 0.0
    %713 = vmatprep.subr.mxu0 0.0
    %714 = vmatpush2.xpose.msra.mxu0 0.0
    %715 = vmatprep.subr.mxu0 0.0
    %716 = vmatpush2.xpose.msra.mxu0 0.0
    %717 = vmatprep.subr.mxu0 0.0
    %718 = vmatpush2.xpose.msra.mxu0 0.0
    %719 = vmatprep.subr.mxu0 0.0
    %720 = vmatpush2.xpose.msra.mxu0 0.0
    %721 = vmatprep.subr.mxu0 0.0
    %722 = vmatpush2.xpose.msra.mxu0 0.0
    %723 = vmatprep.subr.mxu0 0.0
    %724 = vmatpush2.xpose.msra.mxu0 0.0
    %725 = vmatprep.subr.mxu0 0.0
    %726 = vmatpush2.xpose.msra.mxu0 0.0
    %727 = vmatprep.subr.mxu0 0.0
    %728 = vmatpush2.xpose.msra.mxu0 0.0
    %729 = vmatprep.subr.mxu0 0.0
    %730 = vmatpush2.xpose.msra.mxu0 0.0
    %731 = vmatprep.subr.mxu0 0.0
    %732 = vmatpush2.xpose.msra.mxu0 0.0
    %733 = vmatprep.subr.mxu0 0.0
    %734 = vmatpush2.xpose.msra.mxu0 0.0
    %735 = vmatprep.subr.mxu0 0.0
    %736 = vmatpush2.xpose.msra.mxu0 0.0
    %737 = vmatprep.subr.mxu0 0.0
    %738 = vmatpush2.xpose.msra.mxu0 0.0
    %739 = vmatprep.mubr.f32.mxu0 0.0
    %740 = vmatmul.mubr.f32.gmra.mxu0 %v664
    %v741 = vpop.f32.mrf.mxu0
    %v742 = vadd.f32 0.0, %v741
    %v743 = vpop.f32.mrf.mxu0
    %744 = vmatprep.mubr.f32.mxu0 0.0
    %745 = vmatmul.mubr.f32.gmra.mxu0 %v667
    %v746 = vpop.f32.mrf.mxu0
    %v747 = vadd.f32 0.0, %v746
    %v748 = vpop.f32.mrf.mxu0
    %749 = vdwg.mxu0
    %v750 = vmul.f32 %v21, %v21
    %v751 = vmul.f32 %v22, %v22
    %v752 = vmul.f32 %v23, %v23
    %v753 = vmul.f32 %v24, %v24
    %v754 = vmul.f32 %v25, %v25
    %v755 = vmul.f32 %v26, %v26
    %v756 = vmul.f32 %v27, %v27
    %v757 = vmul.f32 %v28, %v28
    %v758 = vmul.f32 %v29, %v29
    %v759 = vmul.f32 %v30, %v30
    %v760 = vmul.f32 %v31, %v31
    %v761 = vmul.f32 %v32, %v32
    %v762 = vmul.f32 %v33, %v33
    %v763 = vmul.f32 %v34, %v34
    %v764 = vmul.f32 %v35, %v35
    %v765 = vmul.f32 %v36, %v36
    %v766 = vsel %vm53, %v750, 0.0
    %767 = vadd.xlane.f32.xlu0 %v766
    %v768 = vpop.xlane.xlu0 %767
    %vm769 = vcmask 256000
    %v770 = vsel %vm769, %v751, 0.0
    %771 = vadd.xlane.f32.xlu0 %v770
    %v772 = vpop.xlane.xlu0 %771
    %v773 = vsel %vm53, %v752, 0.0
    %774 = vadd.xlane.f32.xlu0 %v773
    %v775 = vpop.xlane.xlu0 %774
    %v776 = vsel %vm769, %v753, 0.0
    %777 = vadd.xlane.f32.xlu0 %v776
    %v778 = vpop.xlane.xlu0 %777
    %v779 = vsel %vm53, %v754, 0.0
    %780 = vadd.xlane.f32.xlu0 %v779
    %v781 = vpop.xlane.xlu0 %780
    %v782 = vsel %vm769, %v755, 0.0
    %783 = vadd.xlane.f32.xlu0 %v782
    %v784 = vpop.xlane.xlu0 %783
    %v785 = vsel %vm53, %v756, 0.0
    %786 = vadd.xlane.f32.xlu0 %v785
    %v787 = vpop.xlane.xlu0 %786
    %v788 = vsel %vm769, %v757, 0.0
    %789 = vadd.xlane.f32.xlu0 %v788
    %v790 = vpop.xlane.xlu0 %789
    %v791 = vsel %vm53, %v758, 0.0
    %792 = vadd.xlane.f32.xlu0 %v791
    %v793 = vpop.xlane.xlu0 %792
    %v794 = vsel %vm769, %v759, 0.0
    %795 = vadd.xlane.f32.xlu0 %v794
    %v796 = vpop.xlane.xlu0 %795
    %v797 = vsel %vm53, %v760, 0.0
    %798 = vadd.xlane.f32.xlu0 %v797
    %v799 = vpop.xlane.xlu0 %798
    %v800 = vsel %vm769, %v761, 0.0
    %801 = vadd.xlane.f32.xlu0 %v800
    %v802 = vpop.xlane.xlu0 %801
    %v803 = vsel %vm53, %v762, 0.0
    %804 = vadd.xlane.f32.xlu0 %v803
    %v805 = vpop.xlane.xlu0 %804
    %v806 = vsel %vm769, %v763, 0.0
    %807 = vadd.xlane.f32.xlu0 %v806
    %v808 = vpop.xlane.xlu0 %807
    %v809 = vsel %vm53, %v764, 0.0
    %810 = vadd.xlane.f32.xlu0 %v809
    %v811 = vpop.xlane.xlu0 %810
    %v812 = vsel %vm769, %v765, 0.0
    %813 = vadd.xlane.f32.xlu0 %v812
    %v814 = vpop.xlane.xlu0 %813
    %v815 = vmul.f32 %v37, %v37
    %v816 = vmul.f32 %v38, %v38
    %v817 = vmul.f32 %v39, %v39
    %v818 = vmul.f32 %v40, %v40
    %v819 = vmul.f32 %v41, %v41
    %v820 = vmul.f32 %v42, %v42
    %v821 = vmul.f32 %v43, %v43
    %v822 = vmul.f32 %v44, %v44
    %v823 = vmul.f32 %v45, %v45
    %v824 = vmul.f32 %v46, %v46
    %v825 = vmul.f32 %v47, %v47
    %v826 = vmul.f32 %v48, %v48
    %v827 = vmul.f32 %v49, %v49
    %v828 = vmul.f32 %v50, %v50
    %v829 = vmul.f32 %v51, %v51
    %v830 = vmul.f32 %v52, %v52
    %v831 = vsel %vm53, %v815, 0.0
    %832 = vadd.xlane.f32.xlu0 %v831
    %v833 = vpop.xlane.xlu0 %832
    %v834 = vsel %vm769, %v816, 0.0
    %835 = vadd.xlane.f32.xlu0 %v834
    %v836 = vpop.xlane.xlu0 %835
    %v837 = vsel %vm53, %v817, 0.0
    %838 = vadd.xlane.f32.xlu0 %v837
    %v839 = vpop.xlane.xlu0 %838
    %v840 = vsel %vm769, %v818, 0.0
    %841 = vadd.xlane.f32.xlu0 %v840
    %v842 = vpop.xlane.xlu0 %841
    %v843 = vsel %vm53, %v819, 0.0
    %844 = vadd.xlane.f32.xlu0 %v843
    %v845 = vpop.xlane.xlu0 %844
    %v846 = vsel %vm769, %v820, 0.0
    %847 = vadd.xlane.f32.xlu0 %v846
    %v848 = vpop.xlane.xlu0 %847
    %v849 = vsel %vm53, %v821, 0.0
    %850 = vadd.xlane.f32.xlu0 %v849
    %v851 = vpop.xlane.xlu0 %850
    %v852 = vsel %vm769, %v822, 0.0
    %853 = vadd.xlane.f32.xlu0 %v852
    %v854 = vpop.xlane.xlu0 %853
    %v855 = vsel %vm53, %v823, 0.0
    %856 = vadd.xlane.f32.xlu0 %v855
    %v857 = vpop.xlane.xlu0 %856
    %v858 = vsel %vm769, %v824, 0.0
    %859 = vadd.xlane.f32.xlu0 %v858
    %v860 = vpop.xlane.xlu0 %859
    %v861 = vsel %vm53, %v825, 0.0
    %862 = vadd.xlane.f32.xlu0 %v861
    %v863 = vpop.xlane.xlu0 %862
    %v864 = vsel %vm769, %v826, 0.0
    %865 = vadd.xlane.f32.xlu0 %v864
    %v866 = vpop.xlane.xlu0 %865
    %v867 = vsel %vm53, %v827, 0.0
    %868 = vadd.xlane.f32.xlu0 %v867
    %v869 = vpop.xlane.xlu0 %868
    %v870 = vsel %vm769, %v828, 0.0
    %871 = vadd.xlane.f32.xlu0 %v870
    %v872 = vpop.xlane.xlu0 %871
    %v873 = vsel %vm53, %v829, 0.0
    %874 = vadd.xlane.f32.xlu0 %v873
    %v875 = vpop.xlane.xlu0 %874
    %v876 = vsel %vm769, %v830, 0.0
    %877 = vadd.xlane.f32.xlu0 %v876
    %v878 = vpop.xlane.xlu0 %877
    %v895 = vlaneseq
    %v896 = vand.u32 %v895, 127
    %v897 = vlaneseq
    %v898 = vshrl.u32 %v897, 7
    %v899 = vsub.s32 %v896, %v898
    %v900 = vrot.slane %v833, %v899
    %v901 = vadd.s32 %v896, 4294967288
    %v902 = vlaneseq
    %v903 = vshrl.u32 %v902, 7
    %v904 = vsub.s32 %v901, %v903
    %v905 = vrot.slane %v836, %v904
    %vm906 = vcmask 130112
    %v907 = vsel %vm906, %v905, %v900
    %v908 = vlaneseq
    %v909 = vshrl.u32 %v908, 7
    %v910 = vsub.s32 %v896, %v909
    %v911 = vrot.slane %v839, %v910
    %v912 = vlaneseq
    %v913 = vshrl.u32 %v912, 7
    %v914 = vsub.s32 %v901, %v913
    %v915 = vrot.slane %v842, %v914
    %v916 = vsel %vm906, %v915, %v911
    %v917 = vlaneseq
    %v918 = vshrl.u32 %v917, 7
    %v919 = vsub.s32 %v896, %v918
    %v920 = vrot.slane %v845, %v919
    %v921 = vlaneseq
    %v922 = vshrl.u32 %v921, 7
    %v923 = vsub.s32 %v901, %v922
    %v924 = vrot.slane %v848, %v923
    %v925 = vsel %vm906, %v924, %v920
    %v926 = vlaneseq
    %v927 = vshrl.u32 %v926, 7
    %v928 = vsub.s32 %v896, %v927
    %v929 = vrot.slane %v851, %v928
    %v930 = vlaneseq
    %v931 = vshrl.u32 %v930, 7
    %v932 = vsub.s32 %v901, %v931
    %v933 = vrot.slane %v854, %v932
    %v934 = vsel %vm906, %v933, %v929
    %v935 = vlaneseq
    %v936 = vshrl.u32 %v935, 7
    %v937 = vsub.s32 %v896, %v936
    %v938 = vrot.slane %v857, %v937
    %v939 = vlaneseq
    %v940 = vshrl.u32 %v939, 7
    %v941 = vsub.s32 %v901, %v940
    %v942 = vrot.slane %v860, %v941
    %v943 = vsel %vm906, %v942, %v938
    %v944 = vlaneseq
    %v945 = vshrl.u32 %v944, 7
    %v946 = vsub.s32 %v896, %v945
    %v947 = vrot.slane %v863, %v946
    %v948 = vlaneseq
    %v949 = vshrl.u32 %v948, 7
    %v950 = vsub.s32 %v901, %v949
    %v951 = vrot.slane %v866, %v950
    %v952 = vsel %vm906, %v951, %v947
    %v953 = vlaneseq
    %v954 = vshrl.u32 %v953, 7
    %v955 = vsub.s32 %v896, %v954
    %v956 = vrot.slane %v869, %v955
    %v957 = vlaneseq
    %v958 = vshrl.u32 %v957, 7
    %v959 = vsub.s32 %v901, %v958
    %v960 = vrot.slane %v872, %v959
    %v961 = vsel %vm906, %v960, %v956
    %v962 = vlaneseq
    %v963 = vshrl.u32 %v962, 7
    %v964 = vsub.s32 %v896, %v963
    %v965 = vrot.slane %v875, %v964
    %v966 = vlaneseq
    %v967 = vshrl.u32 %v966, 7
    %v968 = vsub.s32 %v901, %v967
    %v969 = vrot.slane %v878, %v968
    %v970 = vsel %vm906, %v969, %v965
    %vm971 = vcmask 1041409
    %vm972 = vcmask 1042434
    %v973 = vsel %vm972, %v907, %v907
    %vm974 = vcmask 1043459
    %v975 = vsel %vm974, %v907, %v973
    %vm976 = vcmask 1044484
    %v977 = vsel %vm976, %v907, %v975
    %vm978 = vcmask 1045509
    %v979 = vsel %vm978, %v907, %v977
    %vm980 = vcmask 1046534
    %v981 = vsel %vm980, %v907, %v979
    %vm982 = vcmask 1047559
    %v983 = vsel %vm982, %v907, %v981
    %v984 = vsel %vm972, %v916, %v916
    %v985 = vsel %vm974, %v916, %v984
    %v986 = vsel %vm976, %v916, %v985
    %v987 = vsel %vm978, %v916, %v986
    %v988 = vsel %vm980, %v916, %v987
    %v989 = vsel %vm982, %v916, %v988
    %v990 = vsel %vm972, %v925, %v925
    %v991 = vsel %vm974, %v925, %v990
    %v992 = vsel %vm976, %v925, %v991
    %v993 = vsel %vm978, %v925, %v992
    %v994 = vsel %vm980, %v925, %v993
    %v995 = vsel %vm982, %v925, %v994
    %v996 = vsel %vm972, %v934, %v934
    %v997 = vsel %vm974, %v934, %v996
    %v998 = vsel %vm976, %v934, %v997
    %v999 = vsel %vm978, %v934, %v998
    %v1000 = vsel %vm980, %v934, %v999
    %v1001 = vsel %vm982, %v934, %v1000
    %v1002 = vsel %vm972, %v943, %v943
    %v1003 = vsel %vm974, %v943, %v1002
    %v1004 = vsel %vm976, %v943, %v1003
    %v1005 = vsel %vm978, %v943, %v1004
    %v1006 = vsel %vm980, %v943, %v1005
    %v1007 = vsel %vm982, %v943, %v1006
    %v1008 = vsel %vm972, %v952, %v952
    %v1009 = vsel %vm974, %v952, %v1008
    %v1010 = vsel %vm976, %v952, %v1009
    %v1011 = vsel %vm978, %v952, %v1010
    %v1012 = vsel %vm980, %v952, %v1011
    %v1013 = vsel %vm982, %v952, %v1012
    %v1014 = vsel %vm972, %v961, %v961
    %v1015 = vsel %vm974, %v961, %v1014
    %v1016 = vsel %vm976, %v961, %v1015
    %v1017 = vsel %vm978, %v961, %v1016
    %v1018 = vsel %vm980, %v961, %v1017
    %v1019 = vsel %vm982, %v961, %v1018
    %v1020 = vsel %vm972, %v970, %v970
    %v1021 = vsel %vm974, %v970, %v1020
    %v1022 = vsel %vm976, %v970, %v1021
    %v1023 = vsel %vm978, %v970, %v1022
    %v1024 = vsel %vm980, %v970, %v1023
    %v1025 = vsel %vm982, %v970, %v1024
    %v1042 = vadd.f32 %v768, %v983
    %v1043 = vadd.f32 %v772, %v973
    %v1044 = vadd.f32 %v775, %v989
    %v1045 = vadd.f32 %v778, %v984
    %v1046 = vadd.f32 %v781, %v995
    %v1047 = vadd.f32 %v784, %v990
    %v1048 = vadd.f32 %v787, %v1001
    %v1049 = vadd.f32 %v790, %v996
    %v1050 = vadd.f32 %v793, %v1007
    %v1051 = vadd.f32 %v796, %v1002
    %v1052 = vadd.f32 %v799, %v1013
    %v1053 = vadd.f32 %v802, %v1008
    %v1054 = vadd.f32 %v805, %v1019
    %v1055 = vadd.f32 %v808, %v1014
    %v1056 = vadd.f32 %v811, %v1025
    %v1057 = vadd.f32 %v814, %v1020
    %v1058 = vmul.f32 %v133, 2.0
    %v1059 = vmul.f32 %v138, 2.0
    %v1060 = vmul.f32 %v220, 2.0
    %v1061 = vmul.f32 %v225, 2.0
    %v1062 = vmul.f32 %v307, 2.0
    %v1063 = vmul.f32 %v312, 2.0
    %v1064 = vmul.f32 %v394, 2.0
    %v1065 = vmul.f32 %v399, 2.0
    %v1066 = vmul.f32 %v481, 2.0
    %v1067 = vmul.f32 %v486, 2.0
    %v1068 = vmul.f32 %v568, 2.0
    %v1069 = vmul.f32 %v573, 2.0
    %v1070 = vmul.f32 %v655, 2.0
    %v1071 = vmul.f32 %v660, 2.0
    %v1072 = vmul.f32 %v742, 2.0
    %v1073 = vmul.f32 %v747, 2.0
    %v1074 = vsub.f32 %v1042, %v1058
    %v1075 = vsub.f32 %v1043, %v1059
    %v1076 = vsub.f32 %v1044, %v1060
    %v1077 = vsub.f32 %v1045, %v1061
    %v1078 = vsub.f32 %v1046, %v1062
    %v1079 = vsub.f32 %v1047, %v1063
    %v1080 = vsub.f32 %v1048, %v1064
    %v1081 = vsub.f32 %v1049, %v1065
    %v1082 = vsub.f32 %v1050, %v1066
    %v1083 = vsub.f32 %v1051, %v1067
    %v1084 = vsub.f32 %v1052, %v1068
    %v1085 = vsub.f32 %v1053, %v1069
    %v1086 = vsub.f32 %v1054, %v1070
    %v1087 = vsub.f32 %v1055, %v1071
    %v1088 = vsub.f32 %v1056, %v1072
    %v1089 = vsub.f32 %v1057, %v1073
    %v1090 = vmax.f32 %v1074, 0.0
    %v1091 = vmax.f32 %v1075, 0.0
    %v1092 = vmax.f32 %v1076, 0.0
    %v1093 = vmax.f32 %v1077, 0.0
    %v1094 = vmax.f32 %v1078, 0.0
    %v1095 = vmax.f32 %v1079, 0.0
    %v1096 = vmax.f32 %v1080, 0.0
    %v1097 = vmax.f32 %v1081, 0.0
    %v1098 = vmax.f32 %v1082, 0.0
    %v1099 = vmax.f32 %v1083, 0.0
    %v1100 = vmax.f32 %v1084, 0.0
    %v1101 = vmax.f32 %v1085, 0.0
    %v1102 = vmax.f32 %v1086, 0.0
    %v1103 = vmax.f32 %v1087, 0.0
    %v1104 = vmax.f32 %v1088, 0.0
    %v1105 = vmax.f32 %v1089, 0.0
    %v1106 = vrsqrt.pop %v1090
    %v1107 = vmul.f32 %v1090, %v1106
    %vm1108 = vcmp.eq.f32.partialorder %v1090, inf
    %v1109 = vsel %vm1108, %v1090, %v1107
    %vm1110 = vcmp.eq.f32.partialorder %v1090, 0.0
    %v1111 = vand.u32 %v1090, 2147483648
    %v1112 = vsel %vm1110, %v1111, %v1109
    %v1113 = vrsqrt.pop %v1091
    %v1114 = vmul.f32 %v1091, %v1113
    %vm1115 = vcmp.eq.f32.partialorder %v1091, inf
    %v1116 = vsel %vm1115, %v1091, %v1114
    %vm1117 = vcmp.eq.f32.partialorder %v1091, 0.0
    %v1118 = vand.u32 %v1091, 2147483648
    %v1119 = vsel %vm1117, %v1118, %v1116
    %v1120 = vrsqrt.pop %v1092
    %v1121 = vmul.f32 %v1092, %v1120
    %vm1122 = vcmp.eq.f32.partialorder %v1092, inf
    %v1123 = vsel %vm1122, %v1092, %v1121
    %vm1124 = vcmp.eq.f32.partialorder %v1092, 0.0
    %v1125 = vand.u32 %v1092, 2147483648
    %v1126 = vsel %vm1124, %v1125, %v1123
    %v1127 = vrsqrt.pop %v1093
    %v1128 = vmul.f32 %v1093, %v1127
    %vm1129 = vcmp.eq.f32.partialorder %v1093, inf
    %v1130 = vsel %vm1129, %v1093, %v1128
    %vm1131 = vcmp.eq.f32.partialorder %v1093, 0.0
    %v1132 = vand.u32 %v1093, 2147483648
    %v1133 = vsel %vm1131, %v1132, %v1130
    %v1134 = vrsqrt.pop %v1094
    %v1135 = vmul.f32 %v1094, %v1134
    %vm1136 = vcmp.eq.f32.partialorder %v1094, inf
    %v1137 = vsel %vm1136, %v1094, %v1135
    %vm1138 = vcmp.eq.f32.partialorder %v1094, 0.0
    %v1139 = vand.u32 %v1094, 2147483648
    %v1140 = vsel %vm1138, %v1139, %v1137
    %v1141 = vrsqrt.pop %v1095
    %v1142 = vmul.f32 %v1095, %v1141
    %vm1143 = vcmp.eq.f32.partialorder %v1095, inf
    %v1144 = vsel %vm1143, %v1095, %v1142
    %vm1145 = vcmp.eq.f32.partialorder %v1095, 0.0
    %v1146 = vand.u32 %v1095, 2147483648
    %v1147 = vsel %vm1145, %v1146, %v1144
    %v1148 = vrsqrt.pop %v1096
    %v1149 = vmul.f32 %v1096, %v1148
    %vm1150 = vcmp.eq.f32.partialorder %v1096, inf
    %v1151 = vsel %vm1150, %v1096, %v1149
    %vm1152 = vcmp.eq.f32.partialorder %v1096, 0.0
    %v1153 = vand.u32 %v1096, 2147483648
    %v1154 = vsel %vm1152, %v1153, %v1151
    %v1155 = vrsqrt.pop %v1097
    %v1156 = vmul.f32 %v1097, %v1155
    %vm1157 = vcmp.eq.f32.partialorder %v1097, inf
    %v1158 = vsel %vm1157, %v1097, %v1156
    %vm1159 = vcmp.eq.f32.partialorder %v1097, 0.0
    %v1160 = vand.u32 %v1097, 2147483648
    %v1161 = vsel %vm1159, %v1160, %v1158
    %v1162 = vrsqrt.pop %v1098
    %v1163 = vmul.f32 %v1098, %v1162
    %vm1164 = vcmp.eq.f32.partialorder %v1098, inf
    %v1165 = vsel %vm1164, %v1098, %v1163
    %vm1166 = vcmp.eq.f32.partialorder %v1098, 0.0
    %v1167 = vand.u32 %v1098, 2147483648
    %v1168 = vsel %vm1166, %v1167, %v1165
    %v1169 = vrsqrt.pop %v1099
    %v1170 = vmul.f32 %v1099, %v1169
    %vm1171 = vcmp.eq.f32.partialorder %v1099, inf
    %v1172 = vsel %vm1171, %v1099, %v1170
    %vm1173 = vcmp.eq.f32.partialorder %v1099, 0.0
    %v1174 = vand.u32 %v1099, 2147483648
    %v1175 = vsel %vm1173, %v1174, %v1172
    %v1176 = vrsqrt.pop %v1100
    %v1177 = vmul.f32 %v1100, %v1176
    %vm1178 = vcmp.eq.f32.partialorder %v1100, inf
    %v1179 = vsel %vm1178, %v1100, %v1177
    %vm1180 = vcmp.eq.f32.partialorder %v1100, 0.0
    %v1181 = vand.u32 %v1100, 2147483648
    %v1182 = vsel %vm1180, %v1181, %v1179
    %v1183 = vrsqrt.pop %v1101
    %v1184 = vmul.f32 %v1101, %v1183
    %vm1185 = vcmp.eq.f32.partialorder %v1101, inf
    %v1186 = vsel %vm1185, %v1101, %v1184
    %vm1187 = vcmp.eq.f32.partialorder %v1101, 0.0
    %v1188 = vand.u32 %v1101, 2147483648
    %v1189 = vsel %vm1187, %v1188, %v1186
    %v1190 = vrsqrt.pop %v1102
    %v1191 = vmul.f32 %v1102, %v1190
    %vm1192 = vcmp.eq.f32.partialorder %v1102, inf
    %v1193 = vsel %vm1192, %v1102, %v1191
    %vm1194 = vcmp.eq.f32.partialorder %v1102, 0.0
    %v1195 = vand.u32 %v1102, 2147483648
    %v1196 = vsel %vm1194, %v1195, %v1193
    %v1197 = vrsqrt.pop %v1103
    %v1198 = vmul.f32 %v1103, %v1197
    %vm1199 = vcmp.eq.f32.partialorder %v1103, inf
    %v1200 = vsel %vm1199, %v1103, %v1198
    %vm1201 = vcmp.eq.f32.partialorder %v1103, 0.0
    %v1202 = vand.u32 %v1103, 2147483648
    %v1203 = vsel %vm1201, %v1202, %v1200
    %v1204 = vrsqrt.pop %v1104
    %v1205 = vmul.f32 %v1104, %v1204
    %vm1206 = vcmp.eq.f32.partialorder %v1104, inf
    %v1207 = vsel %vm1206, %v1104, %v1205
    %vm1208 = vcmp.eq.f32.partialorder %v1104, 0.0
    %v1209 = vand.u32 %v1104, 2147483648
    %v1210 = vsel %vm1208, %v1209, %v1207
    %v1211 = vrsqrt.pop %v1105
    %v1212 = vmul.f32 %v1105, %v1211
    %vm1213 = vcmp.eq.f32.partialorder %v1105, inf
    %v1214 = vsel %vm1213, %v1105, %v1212
    %vm1215 = vcmp.eq.f32.partialorder %v1105, 0.0
    %v1216 = vand.u32 %v1105, 2147483648
    %v1217 = vsel %vm1215, %v1216, %v1214
    %v1218 = vadd.f32 %v1112, 1.0
    %v1219 = vadd.f32 %v1119, 1.0
    %v1220 = vadd.f32 %v1126, 1.0
    %v1221 = vadd.f32 %v1133, 1.0
    %v1222 = vadd.f32 %v1140, 1.0
    %v1223 = vadd.f32 %v1147, 1.0
    %v1224 = vadd.f32 %v1154, 1.0
    %v1225 = vadd.f32 %v1161, 1.0
    %v1226 = vadd.f32 %v1168, 1.0
    %v1227 = vadd.f32 %v1175, 1.0
    %v1228 = vadd.f32 %v1182, 1.0
    %v1229 = vadd.f32 %v1189, 1.0
    %v1230 = vadd.f32 %v1196, 1.0
    %v1231 = vadd.f32 %v1203, 1.0
    %v1232 = vadd.f32 %v1210, 1.0
    %v1233 = vadd.f32 %v1217, 1.0
    %v1234 = vrcp.pop %v1218
    %v1235 = vrcp.pop %v1219
    %v1236 = vrcp.pop %v1220
    %v1237 = vrcp.pop %v1221
    %v1238 = vrcp.pop %v1222
    %v1239 = vrcp.pop %v1223
    %v1240 = vrcp.pop %v1224
    %v1241 = vrcp.pop %v1225
    %v1242 = vrcp.pop %v1226
    %v1243 = vrcp.pop %v1227
    %v1244 = vrcp.pop %v1228
    %v1245 = vrcp.pop %v1229
    %v1246 = vrcp.pop %v1230
    %v1247 = vrcp.pop %v1231
    %v1248 = vrcp.pop %v1232
    %v1249 = vrcp.pop %v1233
    %vm1250 = vcmask 89088
    %v1251 = vsel %vm1250, %v1234, 0.0
    %vm1252 = vcmask 83968
    %v1253 = vsel %vm1252, %v1235, 0.0
    %v1254 = vadd.f32 %v1251, %v1253
    %v1255 = vrot.slane %v1254, 4
    %v1256 = vadd.f32 %v1254, %v1255
    %v1257 = vrot.slane %v1256, 2
    %v1258 = vadd.f32 %v1256, %v1257
    %v1259 = vrot.slane %v1258, 1
    %v1260 = vadd.f32 %v1258, %v1259
    %v1261 = vsel %vm1250, %v1236, 0.0
    %v1262 = vsel %vm1252, %v1237, 0.0
    %v1263 = vadd.f32 %v1261, %v1262
    %v1264 = vrot.slane %v1263, 4
    %v1265 = vadd.f32 %v1263, %v1264
    %v1266 = vrot.slane %v1265, 2
    %v1267 = vadd.f32 %v1265, %v1266
    %v1268 = vrot.slane %v1267, 1
    %v1269 = vadd.f32 %v1267, %v1268
    %v1270 = vsel %vm1250, %v1238, 0.0
    %v1271 = vsel %vm1252, %v1239, 0.0
    %v1272 = vadd.f32 %v1270, %v1271
    %v1273 = vrot.slane %v1272, 4
    %v1274 = vadd.f32 %v1272, %v1273
    %v1275 = vrot.slane %v1274, 2
    %v1276 = vadd.f32 %v1274, %v1275
    %v1277 = vrot.slane %v1276, 1
    %v1278 = vadd.f32 %v1276, %v1277
    %v1279 = vsel %vm1250, %v1240, 0.0
    %v1280 = vsel %vm1252, %v1241, 0.0
    %v1281 = vadd.f32 %v1279, %v1280
    %v1282 = vrot.slane %v1281, 4
    %v1283 = vadd.f32 %v1281, %v1282
    %v1284 = vrot.slane %v1283, 2
    %v1285 = vadd.f32 %v1283, %v1284
    %v1286 = vrot.slane %v1285, 1
    %v1287 = vadd.f32 %v1285, %v1286
    %v1288 = vsel %vm1250, %v1242, 0.0
    %v1289 = vsel %vm1252, %v1243, 0.0
    %v1290 = vadd.f32 %v1288, %v1289
    %v1291 = vrot.slane %v1290, 4
    %v1292 = vadd.f32 %v1290, %v1291
    %v1293 = vrot.slane %v1292, 2
    %v1294 = vadd.f32 %v1292, %v1293
    %v1295 = vrot.slane %v1294, 1
    %v1296 = vadd.f32 %v1294, %v1295
    %v1297 = vsel %vm1250, %v1244, 0.0
    %v1298 = vsel %vm1252, %v1245, 0.0
    %v1299 = vadd.f32 %v1297, %v1298
    %v1300 = vrot.slane %v1299, 4
    %v1301 = vadd.f32 %v1299, %v1300
    %v1302 = vrot.slane %v1301, 2
    %v1303 = vadd.f32 %v1301, %v1302
    %v1304 = vrot.slane %v1303, 1
    %v1305 = vadd.f32 %v1303, %v1304
    %v1306 = vsel %vm1250, %v1246, 0.0
    %v1307 = vsel %vm1252, %v1247, 0.0
    %v1308 = vadd.f32 %v1306, %v1307
    %v1309 = vrot.slane %v1308, 4
    %v1310 = vadd.f32 %v1308, %v1309
    %v1311 = vrot.slane %v1310, 2
    %v1312 = vadd.f32 %v1310, %v1311
    %v1313 = vrot.slane %v1312, 1
    %v1314 = vadd.f32 %v1312, %v1313
    %v1315 = vsel %vm1250, %v1248, 0.0
    %v1316 = vsel %vm1252, %v1249, 0.0
    %v1317 = vadd.f32 %v1315, %v1316
    %v1318 = vrot.slane %v1317, 4
    %v1319 = vadd.f32 %v1317, %v1318
    %v1320 = vrot.slane %v1319, 2
    %v1321 = vadd.f32 %v1319, %v1320
    %v1322 = vrot.slane %v1321, 1
    %v1323 = vadd.f32 %v1321, %v1322
    %1324 = vadd.xlane.f32.xlu0 %v1251
    %v1325 = vpop.xlane.xlu0 %1324
    %1326 = vadd.xlane.f32.xlu0 %v1253
    %v1327 = vpop.xlane.xlu0 %1326
    %1328 = vadd.xlane.f32.xlu0 %v1261
    %v1329 = vpop.xlane.xlu0 %1328
    %1330 = vadd.xlane.f32.xlu0 %v1262
    %v1331 = vpop.xlane.xlu0 %1330
    %1332 = vadd.xlane.f32.xlu0 %v1270
    %v1333 = vpop.xlane.xlu0 %1332
    %1334 = vadd.xlane.f32.xlu0 %v1271
    %v1335 = vpop.xlane.xlu0 %1334
    %1336 = vadd.xlane.f32.xlu0 %v1279
    %v1337 = vpop.xlane.xlu0 %1336
    %1338 = vadd.xlane.f32.xlu0 %v1280
    %v1339 = vpop.xlane.xlu0 %1338
    %1340 = vadd.xlane.f32.xlu0 %v1288
    %v1341 = vpop.xlane.xlu0 %1340
    %1342 = vadd.xlane.f32.xlu0 %v1289
    %v1343 = vpop.xlane.xlu0 %1342
    %1344 = vadd.xlane.f32.xlu0 %v1297
    %v1345 = vpop.xlane.xlu0 %1344
    %1346 = vadd.xlane.f32.xlu0 %v1298
    %v1347 = vpop.xlane.xlu0 %1346
    %1348 = vadd.xlane.f32.xlu0 %v1306
    %v1349 = vpop.xlane.xlu0 %1348
    %1350 = vadd.xlane.f32.xlu0 %v1307
    %v1351 = vpop.xlane.xlu0 %1350
    %1352 = vadd.xlane.f32.xlu0 %v1315
    %v1353 = vpop.xlane.xlu0 %1352
    %1354 = vadd.xlane.f32.xlu0 %v1316
    %v1355 = vpop.xlane.xlu0 %1354
    %v1356 = vlaneseq
    %v1357 = vshrl.u32 %v1356, 7
    %vm1358 = vcmp.ge.s32.totalorder %v896, %v1357
    %v1359 = vadd.s32 %v1357, 4
    %vm1360 = vcmp.lt.s32.totalorder %v896, %v1359
    %vm1361 = vmand %vm1358, %vm1360
    %v1362 = vsel %vm1361, 1, 0
    %v1363 = vcvt.s32.f32 %v1362
    %v1364 = vadd.s32 %v896, 128
    %v1365 = vmul.u32 %v1357, 32
    %vm1366 = vcmp.ge.s32.totalorder %v896, %v1365
    %vm1367 = vcmp.ge.s32.totalorder %v1364, %v1365
    %v1368 = vadd.s32 %v1357, 1
    %v1369 = vmul.u32 %v1368, 32
    %vm1370 = vcmp.lt.s32.totalorder %v896, %v1369
    %vm1371 = vcmp.lt.s32.totalorder %v1364, %v1369
    %vm1372 = vmand %vm1366, %vm1370
    %vm1373 = vmand %vm1367, %vm1371
    %v1374 = vsel %vm1372, 1, 0
    %v1375 = vsel %vm1373, 1, 0
    %v1376 = vcvt.s32.f32 %v1374
    %v1377 = vcvt.s32.f32 %v1375
    %v1386 = vsel %vm971, %v1269, %v1260
    %v1387 = vsel %vm972, %v1278, %v1386
    %v1388 = vsel %vm974, %v1287, %v1387
    %v1389 = vsel %vm976, %v1296, %v1388
    %v1390 = vsel %vm978, %v1305, %v1389
    %v1391 = vsel %vm980, %v1314, %v1390
    %v1392 = vsel %vm982, %v1323, %v1391
    %1394 = vxpose.xlu0.b32.start [1/16] %v1392, 128
    %1395 = vxpose.xlu0.b32.cont [2/16] 0.0, 128
    %1396 = vxpose.xlu0.b32.cont [3/16] 0.0, 128
    %1397 = vxpose.xlu0.b32.cont [4/16] 0.0, 128
    %1398 = vxpose.xlu0.b32.cont [5/16] 0.0, 128
    %1399 = vxpose.xlu0.b32.cont [6/16] 0.0, 128
    %1400 = vxpose.xlu0.b32.cont [7/16] 0.0, 128
    %1401 = vxpose.xlu0.b32.cont [8/16] 0.0, 128
    %1402 = vxpose.xlu0.b32.cont [9/16] 0.0, 128
    %1403 = vxpose.xlu0.b32.cont [10/16] 0.0, 128
    %1404 = vxpose.xlu0.b32.cont [11/16] 0.0, 128
    %1405 = vxpose.xlu0.b32.cont [12/16] 0.0, 128
    %1406 = vxpose.xlu0.b32.cont [13/16] 0.0, 128
    %1407 = vxpose.xlu0.b32.cont [14/16] 0.0, 128
    %1408 = vxpose.xlu0.b32.cont [15/16] 0.0, 128
    %1409 = vxpose.xlu0.b32.end [16/16] 0.0, 128
    %v1410 = vpop.trf.xlu0
    %v1411 = vpop.trf.xlu0
    %v1412 = vpop.trf.xlu0
    %v1413 = vpop.trf.xlu0
    %v1414 = vpop.trf.xlu0
    %v1415 = vpop.trf.xlu0
    %v1416 = vpop.trf.xlu0
    %v1417 = vpop.trf.xlu0
    %v1418 = vpop.trf.xlu0
    %v1419 = vpop.trf.xlu0
    %v1420 = vpop.trf.xlu0
    %v1421 = vpop.trf.xlu0
    %v1422 = vpop.trf.xlu0
    %v1423 = vpop.trf.xlu0
    %v1424 = vpop.trf.xlu0
    %v1425 = vpop.trf.xlu0
    %vm1426 = vcmask 64512
    %v1428 = vsel %vm1426, %v1410, 0
    %v1431 = vsel %vm1426, %v1411, 0
    %1433 = vmatprep.subr.mxu0 0.0
    %1434 = vmatpush1.msra.mxu0 0.0
    %1435 = vmatprep.subr.mxu0 0.0
    %1436 = vmatpush1.msra.mxu0 0.0
    %1437 = vmatprep.subr.mxu0 0.0
    %1438 = vmatpush1.msra.mxu0 0.0
    %1439 = vmatprep.subr.mxu0 0.0
    %1440 = vmatpush1.msra.mxu0 0.0
    %1441 = vmatprep.subr.mxu0 0.0
    %1442 = vmatpush1.msra.mxu0 0.0
    %1443 = vmatprep.subr.mxu0 0.0
    %1444 = vmatpush1.msra.mxu0 0.0
    %1445 = vmatprep.subr.mxu0 0.0
    %1446 = vmatpush1.msra.mxu0 0.0
    %1447 = vmatprep.subr.mxu0 0.0
    %1448 = vmatpush1.msra.mxu0 0.0
    %1449 = vmatprep.subr.mxu0 0.0
    %1450 = vmatpush1.msra.mxu0 0.0
    %1451 = vmatprep.subr.mxu0 0.0
    %1452 = vmatpush1.msra.mxu0 0.0
    %1453 = vmatprep.subr.mxu0 0.0
    %1454 = vmatpush1.msra.mxu0 0.0
    %1455 = vmatprep.subr.mxu0 0.0
    %1456 = vmatpush1.msra.mxu0 0.0
    %1457 = vmatprep.subr.mxu0 0.0
    %1458 = vmatpush1.msra.mxu0 0.0
    %1459 = vmatprep.subr.mxu0 0.0
    %1460 = vmatpush1.msra.mxu0 0.0
    %1461 = vmatprep.subr.mxu0 0.0
    %1462 = vmatpush1.msra.mxu0 0.0
    %1463 = vmatprep.subr.mxu0 %v1377
    %1464 = vmatpush1.msra.mxu0 %v1376
    %1465 = vmatprep.subr.mxu0 0.0
    %1466 = vmatpush2.msra.mxu0 0.0
    %1467 = vmatprep.subr.mxu0 0.0
    %1468 = vmatpush2.msra.mxu0 0.0
    %1469 = vmatprep.subr.mxu0 0.0
    %1470 = vmatpush2.msra.mxu0 0.0
    %1471 = vmatprep.subr.mxu0 0.0
    %1472 = vmatpush2.msra.mxu0 0.0
    %1473 = vmatprep.subr.mxu0 0.0
    %1474 = vmatpush2.msra.mxu0 0.0
    %1475 = vmatprep.subr.mxu0 0.0
    %1476 = vmatpush2.msra.mxu0 0.0
    %1477 = vmatprep.subr.mxu0 0.0
    %1478 = vmatpush2.msra.mxu0 0.0
    %1479 = vmatprep.subr.mxu0 0.0
    %1480 = vmatpush2.msra.mxu0 0.0
    %1481 = vmatprep.subr.mxu0 0.0
    %1482 = vmatpush2.msra.mxu0 0.0
    %1483 = vmatprep.subr.mxu0 0.0
    %1484 = vmatpush2.msra.mxu0 0.0
    %1485 = vmatprep.subr.mxu0 0.0
    %1486 = vmatpush2.msra.mxu0 0.0
    %1487 = vmatprep.subr.mxu0 0.0
    %1488 = vmatpush2.msra.mxu0 0.0
    %1489 = vmatprep.subr.mxu0 0.0
    %1490 = vmatpush2.msra.mxu0 0.0
    %1491 = vmatprep.subr.mxu0 0.0
    %1492 = vmatpush2.msra.mxu0 0.0
    %1493 = vmatprep.subr.mxu0 0.0
    %1494 = vmatpush2.msra.mxu0 0.0
    %1495 = vmatprep.subr.mxu0 0.0
    %1496 = vmatpush2.msra.mxu0 0.0
    %1497 = vmatprep.mubr.f32.mxu0 0.0
    %1498 = vmatmul.mubr.f32.gmra.mxu0 %v1428
    %v1499 = vpop.f32.mrf.mxu0
    %v1500 = vadd.f32 0.0, %v1499
    %v1501 = vpop.f32.mrf.mxu0
    %v1502 = vadd.f32 0.0, %v1501
    %1503 = vmatprep.mubr.f32.mxu0 0.0
    %1504 = vmatmul.mubr.f32.gmra.mxu0 %v1431
    %v1505 = vpop.f32.mrf.mxu0
    %v1506 = vadd.f32 0.0, %v1505
    %v1507 = vpop.f32.mrf.mxu0
    %v1508 = vadd.f32 0.0, %v1507
    %1509 = vdwg.mxu0
    %v1526 = vlaneseq
    %v1527 = vshrl.u32 %v1526, 7
    %v1528 = vsub.s32 %v896, %v1527
    %v1529 = vrot.slane %v1325, %v1528
    %v1530 = vlaneseq
    %v1531 = vshrl.u32 %v1530, 7
    %v1532 = vsub.s32 %v901, %v1531
    %v1533 = vrot.slane %v1327, %v1532
    %v1534 = vsel %vm906, %v1533, %v1529
    %v1535 = vlaneseq
    %v1536 = vshrl.u32 %v1535, 7
    %v1537 = vsub.s32 %v896, %v1536
    %v1538 = vrot.slane %v1329, %v1537
    %v1539 = vlaneseq
    %v1540 = vshrl.u32 %v1539, 7
    %v1541 = vsub.s32 %v901, %v1540
    %v1542 = vrot.slane %v1331, %v1541
    %v1543 = vsel %vm906, %v1542, %v1538
    %v1544 = vlaneseq
    %v1545 = vshrl.u32 %v1544, 7
    %v1546 = vsub.s32 %v896, %v1545
    %v1547 = vrot.slane %v1333, %v1546
    %v1548 = vlaneseq
    %v1549 = vshrl.u32 %v1548, 7
    %v1550 = vsub.s32 %v901, %v1549
    %v1551 = vrot.slane %v1335, %v1550
    %v1552 = vsel %vm906, %v1551, %v1547
    %v1553 = vlaneseq
    %v1554 = vshrl.u32 %v1553, 7
    %v1555 = vsub.s32 %v896, %v1554
    %v1556 = vrot.slane %v1337, %v1555
    %v1557 = vlaneseq
    %v1558 = vshrl.u32 %v1557, 7
    %v1559 = vsub.s32 %v901, %v1558
    %v1560 = vrot.slane %v1339, %v1559
    %v1561 = vsel %vm906, %v1560, %v1556
    %v1562 = vlaneseq
    %v1563 = vshrl.u32 %v1562, 7
    %v1564 = vsub.s32 %v896, %v1563
    %v1565 = vrot.slane %v1341, %v1564
    %v1566 = vlaneseq
    %v1567 = vshrl.u32 %v1566, 7
    %v1568 = vsub.s32 %v901, %v1567
    %v1569 = vrot.slane %v1343, %v1568
    %v1570 = vsel %vm906, %v1569, %v1565
    %v1571 = vlaneseq
    %v1572 = vshrl.u32 %v1571, 7
    %v1573 = vsub.s32 %v896, %v1572
    %v1574 = vrot.slane %v1345, %v1573
    %v1575 = vlaneseq
    %v1576 = vshrl.u32 %v1575, 7
    %v1577 = vsub.s32 %v901, %v1576
    %v1578 = vrot.slane %v1347, %v1577
    %v1579 = vsel %vm906, %v1578, %v1574
    %v1580 = vlaneseq
    %v1581 = vshrl.u32 %v1580, 7
    %v1582 = vsub.s32 %v896, %v1581
    %v1583 = vrot.slane %v1349, %v1582
    %v1584 = vlaneseq
    %v1585 = vshrl.u32 %v1584, 7
    %v1586 = vsub.s32 %v901, %v1585
    %v1587 = vrot.slane %v1351, %v1586
    %v1588 = vsel %vm906, %v1587, %v1583
    %v1589 = vlaneseq
    %v1590 = vshrl.u32 %v1589, 7
    %v1591 = vsub.s32 %v896, %v1590
    %v1592 = vrot.slane %v1353, %v1591
    %v1593 = vlaneseq
    %v1594 = vshrl.u32 %v1593, 7
    %v1595 = vsub.s32 %v901, %v1594
    %v1596 = vrot.slane %v1355, %v1595
    %v1597 = vsel %vm906, %v1596, %v1592
    %v1598 = vsel %vm971, %v1543, %v1534
    %v1599 = vsel %vm972, %v1552, %v1598
    %v1600 = vsel %vm974, %v1561, %v1599
    %v1601 = vsel %vm976, %v1570, %v1600
    %v1602 = vsel %vm978, %v1579, %v1601
    %v1603 = vsel %vm980, %v1588, %v1602
    %v1604 = vsel %vm982, %v1597, %v1603
    %1606 = vxpose.xlu0.b32.start [1/16] %v1604, 128
    %1607 = vxpose.xlu0.b32.cont [2/16] 0.0, 128
    %1608 = vxpose.xlu0.b32.cont [3/16] 0.0, 128
    %1609 = vxpose.xlu0.b32.cont [4/16] 0.0, 128
    %1610 = vxpose.xlu0.b32.cont [5/16] 0.0, 128
    %1611 = vxpose.xlu0.b32.cont [6/16] 0.0, 128
    %1612 = vxpose.xlu0.b32.cont [7/16] 0.0, 128
    %1613 = vxpose.xlu0.b32.cont [8/16] 0.0, 128
    %1614 = vxpose.xlu0.b32.cont [9/16] 0.0, 128
    %1615 = vxpose.xlu0.b32.cont [10/16] 0.0, 128
    %1616 = vxpose.xlu0.b32.cont [11/16] 0.0, 128
    %1617 = vxpose.xlu0.b32.cont [12/16] 0.0, 128
    %1618 = vxpose.xlu0.b32.cont [13/16] 0.0, 128
    %1619 = vxpose.xlu0.b32.cont [14/16] 0.0, 128
    %1620 = vxpose.xlu0.b32.cont [15/16] 0.0, 128
    %1621 = vxpose.xlu0.b32.end [16/16] 0.0, 128
    %v1622 = vpop.trf.xlu0
    %v1623 = vpop.trf.xlu0
    %v1624 = vpop.trf.xlu0
    %v1625 = vpop.trf.xlu0
    %v1626 = vpop.trf.xlu0
    %v1627 = vpop.trf.xlu0
    %v1628 = vpop.trf.xlu0
    %v1629 = vpop.trf.xlu0
    %v1630 = vpop.trf.xlu0
    %v1631 = vpop.trf.xlu0
    %v1632 = vpop.trf.xlu0
    %v1633 = vpop.trf.xlu0
    %v1634 = vpop.trf.xlu0
    %v1635 = vpop.trf.xlu0
    %v1636 = vpop.trf.xlu0
    %v1637 = vpop.trf.xlu0
    %v1639 = vsel %vm1426, %v1622, 0
    %v1642 = vsel %vm1426, %v1623, 0
    %1644 = vmatprep.subr.mxu0 0.0
    %1645 = vmatpush1.msra.mxu0 0.0
    %1646 = vmatprep.subr.mxu0 0.0
    %1647 = vmatpush1.msra.mxu0 0.0
    %1648 = vmatprep.subr.mxu0 0.0
    %1649 = vmatpush1.msra.mxu0 0.0
    %1650 = vmatprep.subr.mxu0 0.0
    %1651 = vmatpush1.msra.mxu0 0.0
    %1652 = vmatprep.subr.mxu0 0.0
    %1653 = vmatpush1.msra.mxu0 0.0
    %1654 = vmatprep.subr.mxu0 0.0
    %1655 = vmatpush1.msra.mxu0 0.0
    %1656 = vmatprep.subr.mxu0 0.0
    %1657 = vmatpush1.msra.mxu0 0.0
    %1658 = vmatprep.subr.mxu0 0.0
    %1659 = vmatpush1.msra.mxu0 0.0
    %1660 = vmatprep.subr.mxu0 0.0
    %1661 = vmatpush1.msra.mxu0 0.0
    %1662 = vmatprep.subr.mxu0 0.0
    %1663 = vmatpush1.msra.mxu0 0.0
    %1664 = vmatprep.subr.mxu0 0.0
    %1665 = vmatpush1.msra.mxu0 0.0
    %1666 = vmatprep.subr.mxu0 0.0
    %1667 = vmatpush1.msra.mxu0 0.0
    %1668 = vmatprep.subr.mxu0 0.0
    %1669 = vmatpush1.msra.mxu0 0.0
    %1670 = vmatprep.subr.mxu0 0.0
    %1671 = vmatpush1.msra.mxu0 0.0
    %1672 = vmatprep.subr.mxu0 0.0
    %1673 = vmatpush1.msra.mxu0 0.0
    %1674 = vmatprep.subr.mxu0 %v1377
    %1675 = vmatpush1.msra.mxu0 %v1376
    %1676 = vmatprep.subr.mxu0 0.0
    %1677 = vmatpush2.msra.mxu0 0.0
    %1678 = vmatprep.subr.mxu0 0.0
    %1679 = vmatpush2.msra.mxu0 0.0
    %1680 = vmatprep.subr.mxu0 0.0
    %1681 = vmatpush2.msra.mxu0 0.0
    %1682 = vmatprep.subr.mxu0 0.0
    %1683 = vmatpush2.msra.mxu0 0.0
    %1684 = vmatprep.subr.mxu0 0.0
    %1685 = vmatpush2.msra.mxu0 0.0
    %1686 = vmatprep.subr.mxu0 0.0
    %1687 = vmatpush2.msra.mxu0 0.0
    %1688 = vmatprep.subr.mxu0 0.0
    %1689 = vmatpush2.msra.mxu0 0.0
    %1690 = vmatprep.subr.mxu0 0.0
    %1691 = vmatpush2.msra.mxu0 0.0
    %1692 = vmatprep.subr.mxu0 0.0
    %1693 = vmatpush2.msra.mxu0 0.0
    %1694 = vmatprep.subr.mxu0 0.0
    %1695 = vmatpush2.msra.mxu0 0.0
    %1696 = vmatprep.subr.mxu0 0.0
    %1697 = vmatpush2.msra.mxu0 0.0
    %1698 = vmatprep.subr.mxu0 0.0
    %1699 = vmatpush2.msra.mxu0 0.0
    %1700 = vmatprep.subr.mxu0 0.0
    %1701 = vmatpush2.msra.mxu0 0.0
    %1702 = vmatprep.subr.mxu0 0.0
    %1703 = vmatpush2.msra.mxu0 0.0
    %1704 = vmatprep.subr.mxu0 0.0
    %1705 = vmatpush2.msra.mxu0 0.0
    %1706 = vmatprep.subr.mxu0 0.0
    %1707 = vmatpush2.msra.mxu0 0.0
    %1708 = vmatprep.mubr.f32.mxu0 0.0
    %1709 = vmatmul.mubr.f32.gmra.mxu0 %v1639
    %v1710 = vpop.f32.mrf.mxu0
    %v1711 = vadd.f32 0.0, %v1710
    %v1712 = vpop.f32.mrf.mxu0
    %v1713 = vadd.f32 0.0, %v1712
    %1714 = vmatprep.mubr.f32.mxu0 0.0
    %1715 = vmatmul.mubr.f32.gmra.mxu0 %v1642
    %v1716 = vpop.f32.mrf.mxu0
    %v1717 = vadd.f32 0.0, %v1716
    %v1718 = vpop.f32.mrf.mxu0
    %v1719 = vadd.f32 0.0, %v1718
    %1720 = vdwg.mxu0
    %v1721 = vld [vmem:[%s2] sm:$0xff]
    %v1722 = vld [vmem:[%s2 + $0x8] sm:$0xff]
    %v1723 = vld [vmem:[%s2 + $0x10] sm:$0x7]
    %v1724 = vld [vmem:[%s2 + $0x18] sm:$0x7]
    %v1725 = vld [vmem:[%s3] sm:$0xff]
    %v1726 = vld [vmem:[%s3 + $0x8] sm:$0xff]
    %v1727 = vld [vmem:[%s3 + $0x10] sm:$0x7]
    %v1728 = vld [vmem:[%s3 + $0x18] sm:$0x7]
    %v1729 = vmul.f32 %v1500, %v1721
    %v1730 = vmul.f32 %v1502, %v1722
    %v1731 = vmul.f32 %v1506, %v1723
    %v1732 = vmul.f32 %v1508, %v1724
    %v1734 = vsel %vm1250, %v1363, 0
    %vm1736 = vcmask 1042432
    %v1738 = vsel %vm1736, %v1731, 0
    %v1741 = vsel %vm1736, %v1732, 0
    %1743 = vmatprep.subr.mxu0 0.0
    %1744 = vmatpush1.msra.mxu0 0.0
    %1745 = vmatprep.subr.mxu0 0.0
    %1746 = vmatpush1.msra.mxu0 0.0
    %1747 = vmatprep.subr.mxu0 0.0
    %1748 = vmatpush1.msra.mxu0 0.0
    %1749 = vmatprep.subr.mxu0 0.0
    %1750 = vmatpush1.msra.mxu0 0.0
    %1751 = vmatprep.subr.mxu0 0.0
    %1752 = vmatpush1.msra.mxu0 0.0
    %1753 = vmatprep.subr.mxu0 0.0
    %1754 = vmatpush1.msra.mxu0 0.0
    %1755 = vmatprep.subr.mxu0 0.0
    %1756 = vmatpush1.msra.mxu0 0.0
    %1757 = vmatprep.subr.mxu0 0.0
    %1758 = vmatpush1.msra.mxu0 0.0
    %1759 = vmatprep.subr.mxu0 0.0
    %1760 = vmatpush1.msra.mxu0 0.0
    %1761 = vmatprep.subr.mxu0 0.0
    %1762 = vmatpush1.msra.mxu0 0.0
    %1763 = vmatprep.subr.mxu0 0.0
    %1764 = vmatpush1.msra.mxu0 0.0
    %1765 = vmatprep.subr.mxu0 0.0
    %1766 = vmatpush1.msra.mxu0 0.0
    %1767 = vmatprep.subr.mxu0 0.0
    %1768 = vmatpush1.msra.mxu0 0.0
    %1769 = vmatprep.subr.mxu0 0.0
    %1770 = vmatpush1.msra.mxu0 0.0
    %1771 = vmatprep.subr.mxu0 %v1741
    %1772 = vmatpush1.msra.mxu0 %v1738
    %1773 = vmatprep.subr.mxu0 %v1730
    %1774 = vmatpush1.msra.mxu0 %v1729
    %1775 = vmatprep.subr.mxu0 0.0
    %1776 = vmatpush2.msra.mxu0 0.0
    %1777 = vmatprep.subr.mxu0 0.0
    %1778 = vmatpush2.msra.mxu0 0.0
    %1779 = vmatprep.subr.mxu0 0.0
    %1780 = vmatpush2.msra.mxu0 0.0
    %1781 = vmatprep.subr.mxu0 0.0
    %1782 = vmatpush2.msra.mxu0 0.0
    %1783 = vmatprep.subr.mxu0 0.0
    %1784 = vmatpush2.msra.mxu0 0.0
    %1785 = vmatprep.subr.mxu0 0.0
    %1786 = vmatpush2.msra.mxu0 0.0
    %1787 = vmatprep.subr.mxu0 0.0
    %1788 = vmatpush2.msra.mxu0 0.0
    %1789 = vmatprep.subr.mxu0 0.0
    %1790 = vmatpush2.msra.mxu0 0.0
    %1791 = vmatprep.subr.mxu0 0.0
    %1792 = vmatpush2.msra.mxu0 0.0
    %1793 = vmatprep.subr.mxu0 0.0
    %1794 = vmatpush2.msra.mxu0 0.0
    %1795 = vmatprep.subr.mxu0 0.0
    %1796 = vmatpush2.msra.mxu0 0.0
    %1797 = vmatprep.subr.mxu0 0.0
    %1798 = vmatpush2.msra.mxu0 0.0
    %1799 = vmatprep.subr.mxu0 0.0
    %1800 = vmatpush2.msra.mxu0 0.0
    %1801 = vmatprep.subr.mxu0 0.0
    %1802 = vmatpush2.msra.mxu0 0.0
    %1803 = vmatprep.subr.mxu0 0.0
    %1804 = vmatpush2.msra.mxu0 0.0
    %1805 = vmatprep.subr.mxu0 0.0
    %1806 = vmatpush2.msra.mxu0 0.0
    %1807 = vmatprep.mubr.f32.mxu0 0.0
    %1808 = vmatmul.mubr.f32.gmra.mxu0 %v1734
    %v1809 = vpop.f32.mrf.mxu0
    %v1810 = vadd.f32 0.0, %v1809
    %v1811 = vpop.f32.mrf.mxu0
    %v1812 = vadd.f32 0.0, %v1811
    %1813 = vdwg.mxu0
    %1814 = vst [vmem:[#allocation2] sm:$0xff] %v1810
    %1815 = vst [vmem:[#allocation2 + $0x8] sm:$0xff] %v1812
    %v1816 = vmul.f32 %v1711, %v1725
    %v1817 = vmul.f32 %v1713, %v1726
    %v1818 = vmul.f32 %v1717, %v1727
    %v1819 = vmul.f32 %v1719, %v1728
    %v1821 = vsel %vm1736, %v1818, 0
    %v1824 = vsel %vm1736, %v1819, 0
    %1826 = vmatprep.subr.mxu0 0.0
    %1827 = vmatpush1.msra.mxu0 0.0
    %1828 = vmatprep.subr.mxu0 0.0
    %1829 = vmatpush1.msra.mxu0 0.0
    %1830 = vmatprep.subr.mxu0 0.0
    %1831 = vmatpush1.msra.mxu0 0.0
    %1832 = vmatprep.subr.mxu0 0.0
    %1833 = vmatpush1.msra.mxu0 0.0
    %1834 = vmatprep.subr.mxu0 0.0
    %1835 = vmatpush1.msra.mxu0 0.0
    %1836 = vmatprep.subr.mxu0 0.0
    %1837 = vmatpush1.msra.mxu0 0.0
    %1838 = vmatprep.subr.mxu0 0.0
    %1839 = vmatpush1.msra.mxu0 0.0
    %1840 = vmatprep.subr.mxu0 0.0
    %1841 = vmatpush1.msra.mxu0 0.0
    %1842 = vmatprep.subr.mxu0 0.0
    %1843 = vmatpush1.msra.mxu0 0.0
    %1844 = vmatprep.subr.mxu0 0.0
    %1845 = vmatpush1.msra.mxu0 0.0
    %1846 = vmatprep.subr.mxu0 0.0
    %1847 = vmatpush1.msra.mxu0 0.0
    %1848 = vmatprep.subr.mxu0 0.0
    %1849 = vmatpush1.msra.mxu0 0.0
    %1850 = vmatprep.subr.mxu0 0.0
    %1851 = vmatpush1.msra.mxu0 0.0
    %1852 = vmatprep.subr.mxu0 0.0
    %1853 = vmatpush1.msra.mxu0 0.0
    %1854 = vmatprep.subr.mxu0 %v1824
    %1855 = vmatpush1.msra.mxu0 %v1821
    %1856 = vmatprep.subr.mxu0 %v1817
    %1857 = vmatpush1.msra.mxu0 %v1816
    %1858 = vmatprep.subr.mxu0 0.0
    %1859 = vmatpush2.msra.mxu0 0.0
    %1860 = vmatprep.subr.mxu0 0.0
    %1861 = vmatpush2.msra.mxu0 0.0
    %1862 = vmatprep.subr.mxu0 0.0
    %1863 = vmatpush2.msra.mxu0 0.0
    %1864 = vmatprep.subr.mxu0 0.0
    %1865 = vmatpush2.msra.mxu0 0.0
    %1866 = vmatprep.subr.mxu0 0.0
    %1867 = vmatpush2.msra.mxu0 0.0
    %1868 = vmatprep.subr.mxu0 0.0
    %1869 = vmatpush2.msra.mxu0 0.0
    %1870 = vmatprep.subr.mxu0 0.0
    %1871 = vmatpush2.msra.mxu0 0.0
    %1872 = vmatprep.subr.mxu0 0.0
    %1873 = vmatpush2.msra.mxu0 0.0
    %1874 = vmatprep.subr.mxu0 0.0
    %1875 = vmatpush2.msra.mxu0 0.0
    %1876 = vmatprep.subr.mxu0 0.0
    %1877 = vmatpush2.msra.mxu0 0.0
    %1878 = vmatprep.subr.mxu0 0.0
    %1879 = vmatpush2.msra.mxu0 0.0
    %1880 = vmatprep.subr.mxu0 0.0
    %1881 = vmatpush2.msra.mxu0 0.0
    %1882 = vmatprep.subr.mxu0 0.0
    %1883 = vmatpush2.msra.mxu0 0.0
    %1884 = vmatprep.subr.mxu0 0.0
    %1885 = vmatpush2.msra.mxu0 0.0
    %1886 = vmatprep.subr.mxu0 0.0
    %1887 = vmatpush2.msra.mxu0 0.0
    %1888 = vmatprep.subr.mxu0 0.0
    %1889 = vmatpush2.msra.mxu0 0.0
    %1890 = vmatprep.mubr.f32.mxu0 0.0
    %1891 = vmatmul.mubr.f32.gmra.mxu0 %v1734
    %v1892 = vpop.f32.mrf.mxu0
    %v1893 = vadd.f32 0.0, %v1892
    %v1894 = vpop.f32.mrf.mxu0
    %v1895 = vadd.f32 0.0, %v1894
    %1896 = vdwg.mxu0
    %1897 = vst [vmem:[#allocation4] sm:$0xff] %v1893
    %1898 = vst [vmem:[#allocation4 + $0x8] sm:$0xff] %v1895
    // Predicated region
    $region18: #{tpu_custom_call.1} parent=1 // pred_check
      _
    $region19: #{tpu_custom_call.1} parent=1 // pred_check_branch
      %1900 = sbr.rel (0) target = $region21
    $region20: #{tpu_custom_call.1} parent=1 // pred_region
      %s1902 = ssub.s32 256, 256
      %1903 = vsyncadd [#allocation3], %s1902
      %s1905 = sshll.u32 [#allocation2], 4
      %s1906 = int_to_ptr.vmem [resolvable:$true] %s1905
      %1908 = dma.vmem_to_hbm [thread:$0]  %s1906, 256, %s4, [#allocation3]
    $region21: #{tpu_custom_call.1} parent=1 // pred_fallthru
      _
    // Predicated region
    $region22: #{tpu_custom_call.1} parent=1 // pred_check
      _
    $region23: #{tpu_custom_call.1} parent=1 // pred_check_branch
      %1910 = sbr.rel (0) target = $region25
    $region24: #{tpu_custom_call.1} parent=1 // pred_region
      %s1912 = ssub.s32 256, 256
      %1913 = vsyncadd [#allocation5], %s1912
      %s1915 = sshll.u32 [#allocation4], 4
      %s1916 = int_to_ptr.vmem [resolvable:$true] %s1915
      %1918 = dma.vmem_to_hbm [thread:$0]  %s1916, 256, %s5, [#allocation5]
    $region25: #{tpu_custom_call.1} parent=1 // pred_fallthru
      _
    // Predicated region
    $region26: #{tpu_custom_call.1} parent=1 // pred_check
      _
    $region27: #{tpu_custom_call.1} parent=1 // pred_check_branch
      %1920 = sbr.rel (0) target = $region29
    $region28: #{tpu_custom_call.1} parent=1 // pred_region
      %1921 = dma.done [#allocation3], 256
    $region29: #{tpu_custom_call.1} parent=1 // pred_fallthru
      _
    // Predicated region
    $region30: #{tpu_custom_call.1} parent=1 // pred_check
      _
    $region31: #{tpu_custom_call.1} parent=1 // pred_check_branch
      %1923 = sbr.rel (0) target = $region33
    $region32: #{tpu_custom_call.1} parent=1 // pred_region
      %1924 = dma.done [#allocation5], 256
    $region33: #{tpu_custom_call.1} parent=1 // pred_fallthru
      _
    %1925 = vsyncpa [#allocation3], 1
    %1926 = vsyncpa [#allocation5], 1

</llo_original>
